<compile_context>
chip_gen: v6e
topology: v6e:2x2x1
jax: 0.10.0
libtpu: 0.0.40
codegen_flags: <defaults>
</compile_context>

<pallas_src>
import functools
import math

import jax
import jax.numpy as jnp
from jax.experimental import pallas as pl
from jax.experimental.pallas import tpu as pltpu


# ----------------------------------------------------------------------------
# math helpers shared by the Pallas kernel and the pure-JAX reference
# ----------------------------------------------------------------------------
def _erf_poly(x):
    # TODO(synk): lax.erf has no guaranteed Mosaic lowering; Abramowitz & Stegun
    # 7.1.26 polynomial (max abs err ~1.5e-7) is below f32 noise for this model.
    a1, a2, a3, a4, a5 = 0.254829592, -0.284496736, 1.421413741, -1.453152027, 1.061405429
    p = 0.3275911
    s = jnp.where(x < 0.0, -1.0, 1.0)
    ax = jnp.abs(x)
    t = 1.0 / (1.0 + p * ax)
    poly = ((((a5 * t + a4) * t + a3) * t + a2) * t + a1) * t
    return s * (1.0 - poly * jnp.exp(-ax * ax))


def _gelu_exact(x):
    # nn.GELU() default (erf-based).
    return 0.5 * x * (1.0 + _erf_poly(x * (1.0 / math.sqrt(2.0))))


def _layer_norm_rows(x, g, b, eps=1e-5):
    mu = jnp.mean(x, axis=-1, keepdims=True)
    var = jnp.mean(jnp.square(x - mu), axis=-1, keepdims=True)
    return (x - mu) * jax.lax.rsqrt(var + eps) * g + b


# ----------------------------------------------------------------------------
# fused TinyViT kernel
# ----------------------------------------------------------------------------
def _tinyvit_kernel(num_heads, seq,
                    patches_ref, mask_ref, pw_ref, pb_ref,
                    g1_ref, be1_ref, wqkv_ref, bqkv_ref, wo_ref, bo_ref,
                    g2_ref, be2_ref, w1_ref, b1_ref, w2_ref, b2_ref,
                    gf_ref, bf_ref,
                    o_ref, y_ref):
    layer = pl.program_id(0)
    last = pl.num_programs(0) - 1
    R, D = y_ref.shape                 # R = seq * num_patches, batch-major rows
    H = num_heads
    hd = D // H
    P = R // seq                       # rows of the same patch are P apart
    scale = 1.0 / math.sqrt(hd)

    # ---- layer 0: patch embedding (Conv2d k=s=patch as one matmul) + mask ----
    @pl.when(layer == 0)
    def _():
        emb = jnp.dot(patches_ref[...], pw_ref[...],
                      preferred_element_type=jnp.float32) + pb_ref[...]
        y_ref[...] = emb * mask_ref[...]

    x = y_ref[...]                     # [R, D], resident in VMEM across layers

    # ---- LN1 + fused QKV projection (one [D, 3D] matmul instead of three) ----
    xn = _layer_norm_rows(x, g1_ref[0], be1_ref[0])
    qkv = jnp.dot(xn, wqkv_ref[0], preferred_element_type=jnp.float32) + bqkv_ref[0]

    q = qkv[:, 0:D] * scale
    k0 = qkv[:, D:2 * D]
    v0 = qkv[:, 2 * D:3 * D]

    # Row r = b*P + p attends to rows {b'*P + p}.  A row-roll of K/V by c*P
    # lines query row r up with key/value token (b + c) mod seq of the SAME
    # patch, so attention becomes per-shift broadcast-multiply + lane reduce
    # (pure VPU/XLU work) instead of seq x seq micro-matmuls.
    ks, vs = [k0], [v0]
    for c in range(1, seq):
        sh = c * P
        ks.append(jnp.concatenate([k0[sh:, :], k0[:sh, :]], axis=0))
        vs.append(jnp.concatenate([v0[sh:, :], v0[:sh, :]], axis=0))

    head_outs = []
    for h in range(H):
        lo = h * hd
        qh = q[:, lo:lo + hd]
        s_cols = [jnp.sum(qh * kc[:, lo:lo + hd], axis=-1, keepdims=True)
                  for kc in ks]                              # seq x [R, 1]
        m = s_cols[0]
        for c in range(1, seq):
            m = jnp.maximum(m, s_cols[c])
        es = [jnp.exp(sc - m) for sc in s_cols]
        denom = es[0]
        for c in range(1, seq):
            denom = denom + es[c]
        inv = 1.0 / denom                                    # exact softmax (f32)
        oh = (es[0] * inv) * vs[0][:, lo:lo + hd]
        for c in range(1, seq):
            oh = oh + (es[c] * inv) * vs[c][:, lo:lo + hd]
        head_outs.append(oh)                                 # [R, hd]

    # One D-wide output-projection matmul over the assembled head outputs.
    attn_out = jnp.concatenate(head_outs, axis=-1)           # [R, D]
    x = x + jnp.dot(attn_out, wo_ref[0],
                    preferred_element_type=jnp.float32) + bo_ref[0]

    # ---- LN2 + MLP (Linear -> GELU -> Linear) ----
    xn2 = _layer_norm_rows(x, g2_ref[0], be2_ref[0])
    h1 = _gelu_exact(jnp.dot(xn2, w1_ref[0], preferred_element_type=jnp.float32)
                     + b1_ref[0])
    x = x + jnp.dot(h1, w2_ref[0], preferred_element_type=jnp.float32) + b2_ref[0]

    # Store the resident activation only when another layer will consume it.
    @pl.when(layer < last)
    def _():
        y_ref[...] = x

    # ---- final LayerNorm fused into the last layer iteration ----
    @pl.when(layer == last)
    def _():
        o_ref[...] = _layer_norm_rows(x, gf_ref[...], bf_ref[...])


# ----------------------------------------------------------------------------
# glue: patch extraction, weight packing, forward wrapper
# ----------------------------------------------------------------------------
def extract_patches(x_nchw, patch_size):
    """NCHW -> [B, P, C*ps*ps] with (C, kh, kw) flattening order (= Conv2d weight order)."""
    B, C, H, W = x_nchw.shape
    ph, pw = H // patch_size, W // patch_size
    x = x_nchw.reshape(B, C, ph, patch_size, pw, patch_size)
    x = jnp.transpose(x, (0, 2, 4, 1, 3, 5))
    return x.reshape(B, ph * pw, C * patch_size * patch_size)


def pack_params(params):
    """Stack per-layer weights on a leading layer axis and fuse QKV (done once, outside jit)."""
    blocks = params['blocks']
    stack = lambda name: jnp.stack([b[name] for b in blocks], axis=0)
    return {
        'patch_w_t': params['patch_w_t'],
        'patch_b': params['patch_b'],
        'ln_g': params['ln_g'],
        'ln_b': params['ln_b'],
        'ln1_g': stack('ln1_g'), 'ln1_b': stack('ln1_b'),
        'wqkv_t': jnp.stack(
            [jnp.concatenate([b['wq_t'], b['wk_t'], b['wv_t']], axis=1) for b in blocks], 0),
        'bqkv': jnp.stack(
            [jnp.concatenate([b['bq'], b['bk'], b['bv']], axis=1) for b in blocks], 0),
        'wo_t': stack('wo_t'), 'bo': stack('bo'),
        'ln2_g': stack('ln2_g'), 'ln2_b': stack('ln2_b'),
        'w1_t': stack('w1_t'), 'b1': stack('b1'),
        'w2_t': stack('w2_t'), 'b2': stack('b2'),
    }


def tinyvit_forward(packed, x_nchw, *, patch_size, num_heads, mask=None):
    B = x_nchw.shape[0]
    patches = extract_patches(x_nchw, patch_size)           # [B, P, K]
    _, P, K = patches.shape
    D = packed['patch_w_t'].shape[1]
    depth = packed['wqkv_t'].shape[0]
    R = B * P

    # Flat 2-D activation layout, batch-major rows r = b*P + p (no transposes).
    patches_2d = patches.reshape(R, K)
    if mask is None:
        mask_2d = jnp.ones((R, 1), jnp.float32)
    else:
        mask_2d = mask.astype(jnp.float32).reshape(R, 1)

    def const_spec(arr):
        return pl.BlockSpec(arr.shape, lambda l: (0,) * arr.ndim)

    def layer_spec(arr):
        return pl.BlockSpec((1, arr.shape[1], arr.shape[2]), lambda l: (l, 0, 0))

    in_specs = [
        const_spec(patches_2d),             # [R, K]   (read only at layer 0)
        const_spec(mask_2d),                # [R, 1]   (read only at layer 0)
        const_spec(packed['patch_w_t']),    # [K, D]
        const_spec(packed['patch_b']),      # [1, D]
        layer_spec(packed['ln1_g']),
        layer_spec(packed['ln1_b']),
        layer_spec(packed['wqkv_t']),
        layer_spec(packed['bqkv']),
        layer_spec(packed['wo_t']),
        layer_spec(packed['bo']),
        layer_spec(packed['ln2_g']),
        layer_spec(packed['ln2_b']),
        layer_spec(packed['w1_t']),
        layer_spec(packed['b1']),
        layer_spec(packed['w2_t']),
        layer_spec(packed['b2']),
        const_spec(packed['ln_g']),         # [1, D]
        const_spec(packed['ln_b']),         # [1, D]
    ]

    y_2d = pl.pallas_call(
        functools.partial(_tinyvit_kernel, num_heads, B),
        out_shape=jax.ShapeDtypeStruct((R, D), jnp.float32),
        grid=(depth,),
        in_specs=in_specs,
        out_specs=pl.BlockSpec((R, D), lambda l: (0, 0)),
        scratch_shapes=[pltpu.VMEM((R, D), jnp.float32)],
        compiler_params=pltpu.CompilerParams(
            # Single sequential axis over layers: per-layer weight blocks are
            # double-buffered so layer l+1 weights prefetch during layer l.
            dimension_semantics=("arbitrary",),
            # Tiny config; 32 MiB is safe on v5e/v6e (128 MiB) and v7x (64 MiB).
            vmem_limit_bytes=32 * 1024 * 1024),
    )(patches_2d, mask_2d, packed['patch_w_t'], packed['patch_b'],
      packed['ln1_g'], packed['ln1_b'], packed['wqkv_t'], packed['bqkv'],
      packed['wo_t'], packed['bo'], packed['ln2_g'], packed['ln2_b'],
      packed['w1_t'], packed['b1'], packed['w2_t'], packed['b2'],
      packed['ln_g'], packed['ln_b'])

    return y_2d.reshape(B, P, D)


# ----------------------------------------------------------------------------
# pure-JAX reference (mirrors PyTorch semantics, f32-exact matmuls)
# ----------------------------------------------------------------------------
def reference_forward(params, x_nchw, *, patch_size, num_heads, mask=None):
    hp = jax.lax.Precision.HIGHEST
    dot = functools.partial(jnp.dot, precision=hp)
    patches = extract_patches(x_nchw, patch_size)
    x = dot(patches, params['patch_w_t']) + params['patch_b']   # [B, P, D]
    if mask is not None:
        x = x * mask[..., None]
    B, P, D = x.shape
    hd = D // num_heads
    for blk in params['blocks']:
        xn = _layer_norm_rows(x, blk['ln1_g'], blk['ln1_b'])
        q = dot(xn, blk['wq_t']) + blk['bq']
        k = dot(xn, blk['wk_t']) + blk['bk']
        v = dot(xn, blk['wv_t']) + blk['bv']
        # nn.MultiheadAttention (batch_first=False): axis 0 (B) is the sequence,
        # axis 1 (P) is the attention batch.
        qh = q.reshape(B, P, num_heads, hd)
        kh = k.reshape(B, P, num_heads, hd)
        vh = v.reshape(B, P, num_heads, hd)
        s = jnp.einsum('bphd,cphd->phbc', qh, kh, precision=hp) / math.sqrt(hd)
        a = jax.nn.softmax(s, axis=-1)
        o = jnp.einsum('phbc,cphd->bphd', a, vh, precision=hp).reshape(B, P, D)
        x = x + (dot(o, blk['wo_t']) + blk['bo'])
        xn2 = _layer_norm_rows(x, blk['ln2_g'], blk['ln2_b'])
        h1 = _gelu_exact(dot(xn2, blk['w1_t']) + blk['b1'])
        x = x + (dot(h1, blk['w2_t']) + blk['b2'])
    return _layer_norm_rows(x, params['ln_g'], params['ln_b'])


# ----------------------------------------------------------------------------
# deterministic parameter construction
# ----------------------------------------------------------------------------
def init_params(key, in_channels, patch_size, embed_dim, depth, num_heads, mlp_ratio):
    D = embed_dim
    hidden = int(D * mlp_ratio)
    K = in_channels * patch_size * patch_size

    def w(k, shape, fan_in):
        return jax.random.normal(k, shape, jnp.float32) / math.sqrt(fan_in)

    keys = jax.random.split(key, 4 + depth)
    params = {
        'patch_w_t': w(keys[0], (K, D), K),
        'patch_b': 0.02 * jax.random.normal(keys[1], (1, D), jnp.float32),
        'ln_g': 1.0 + 0.1 * jax.random.normal(keys[2], (1, D), jnp.float32),
        'ln_b': 0.05 * jax.random.normal(keys[3], (1, D), jnp.float32),
        'blocks': [],
    }
    for i in range(depth):
        ks = jax.random.split(keys[4 + i], 16)
        params['blocks'].append({
            'ln1_g': 1.0 + 0.1 * jax.random.normal(ks[0], (1, D), jnp.float32),
            'ln1_b': 0.05 * jax.random.normal(ks[1], (1, D), jnp.float32),
            'wq_t': w(ks[2], (D, D), D),
            'wk_t': w(ks[3], (D, D), D),
            'wv_t': w(ks[4], (D, D), D),
            'bq': 0.02 * jax.random.normal(ks[5], (1, D), jnp.float32),
            'bk': 0.02 * jax.random.normal(ks[6], (1, D), jnp.float32),
            'bv': 0.02 * jax.random.normal(ks[7], (1, D), jnp.float32),
            'wo_t': w(ks[8], (D, D), D),
            'bo': 0.02 * jax.random.normal(ks[9], (1, D), jnp.float32),
            'ln2_g': 1.0 + 0.1 * jax.random.normal(ks[10], (1, D), jnp.float32),
            'ln2_b': 0.05 * jax.random.normal(ks[11], (1, D), jnp.float32),
            'w1_t': w(ks[12], (D, hidden), D),
            'b1': 0.02 * jax.random.normal(ks[13], (1, hidden), jnp.float32),
            'w2_t': w(ks[14], (hidden, D), hidden),
            'b2': 0.02 * jax.random.normal(ks[15], (1, D), jnp.float32),
        })
    return params


if __name__ == "__main__":
    # Small TinyViT config: image 16x16, 4 channels, patch 4 -> 16 patches.
    B, C, H, W = 2, 4, 16, 16
    patch_size = 4
    embed_dim = 32
    depth = 2
    num_heads = 4
    mlp_ratio = 2.0

    key = jax.random.PRNGKey(0)
    kp, kx = jax.random.split(key)
    params = init_params(kp, C, patch_size, embed_dim, depth, num_heads, mlp_ratio)
    x = jax.random.normal(kx, (B, C, H, W), jnp.float32)

    packed = pack_params(params)                  # pack once, outside jit
    fwd = jax.jit(functools.partial(tinyvit_forward,
                                    patch_size=patch_size, num_heads=num_heads))
    out = fwd(packed, x)
    jax.block_until_ready(out)

    num_patches = (H // patch_size) * (W // patch_size)
    assert out.shape == (B, num_patches, embed_dim), out.shape

    ref = reference_forward(params, x, patch_size=patch_size, num_heads=num_heads)
    err = float(jnp.max(jnp.abs(out - ref)))
    # Softmax and normalizations are exact f32 on both sides; the tolerance
    # allows for bf16 MXU passes in f32 matmuls (~2^-9 relative per pass,
    # accumulated over depth).  With fully exact f32 matmuls the observed error
    # is < 1e-4.
    assert err < 2e-2, f"max abs err vs reference: {err}"

    print("KERNEL_OK")
</pallas_src>

<mosaic_0001>
module attributes {stable_mosaic.version = 11 : i64} {
  func.func @_tinyvit_kernel(%arg0: i32, %arg1: memref<32x64xf32, #tpu.memory_space<vmem>>, %arg2: memref<32x1xf32, #tpu.memory_space<vmem>>, %arg3: memref<64x32xf32, #tpu.memory_space<vmem>>, %arg4: memref<1x32xf32, #tpu.memory_space<vmem>>, %arg5: memref<1x1x32xf32, #tpu.memory_space<vmem>>, %arg6: memref<1x1x32xf32, #tpu.memory_space<vmem>>, %arg7: memref<1x32x96xf32, #tpu.memory_space<vmem>>, %arg8: memref<1x1x96xf32, #tpu.memory_space<vmem>>, %arg9: memref<1x32x32xf32, #tpu.memory_space<vmem>>, %arg10: memref<1x1x32xf32, #tpu.memory_space<vmem>>, %arg11: memref<1x1x32xf32, #tpu.memory_space<vmem>>, %arg12: memref<1x1x32xf32, #tpu.memory_space<vmem>>, %arg13: memref<1x32x64xf32, #tpu.memory_space<vmem>>, %arg14: memref<1x1x64xf32, #tpu.memory_space<vmem>>, %arg15: memref<1x64x32xf32, #tpu.memory_space<vmem>>, %arg16: memref<1x1x32xf32, #tpu.memory_space<vmem>>, %arg17: memref<1x32xf32, #tpu.memory_space<vmem>>, %arg18: memref<1x32xf32, #tpu.memory_space<vmem>>, %arg19: memref<32x32xf32, #tpu.memory_space<vmem>>, %arg20: memref<32x32xf32, #tpu.memory_space<vmem>>) attributes {dimension_semantics = [#tpu.dimension_semantics<arbitrary>], iteration_bounds = array<i64: 2>, scalar_prefetch = 0 : i64, scratch_operands = 1 : i64, tpu.core_type = #tpu.core_type<tc>, window_params = [{pipeline_mode = #tpu.pipeline_mode<synchronous>, transform_indices = @transform_0, window_bounds = array<i64: 32, 64>}, {pipeline_mode = #tpu.pipeline_mode<synchronous>, transform_indices = @transform_1, window_bounds = array<i64: 32, 1>}, {pipeline_mode = #tpu.pipeline_mode<synchronous>, transform_indices = @transform_2, window_bounds = array<i64: 64, 32>}, {pipeline_mode = #tpu.pipeline_mode<synchronous>, transform_indices = @transform_3, window_bounds = array<i64: 1, 32>}, {transform_indices = @transform_4, window_bounds = array<i64: 1, 1, 32>}, {transform_indices = @transform_5, window_bounds = array<i64: 1, 1, 32>}, {transform_indices = @transform_6, window_bounds = array<i64: 1, 32, 96>}, {transform_indices = @transform_7, window_bounds = array<i64: 1, 1, 96>}, {transform_indices = @transform_8, window_bounds = array<i64: 1, 32, 32>}, {transform_indices = @transform_9, window_bounds = array<i64: 1, 1, 32>}, {transform_indices = @transform_10, window_bounds = array<i64: 1, 1, 32>}, {transform_indices = @transform_11, window_bounds = array<i64: 1, 1, 32>}, {transform_indices = @transform_12, window_bounds = array<i64: 1, 32, 64>}, {transform_indices = @transform_13, window_bounds = array<i64: 1, 1, 64>}, {transform_indices = @transform_14, window_bounds = array<i64: 1, 64, 32>}, {transform_indices = @transform_15, window_bounds = array<i64: 1, 1, 32>}, {pipeline_mode = #tpu.pipeline_mode<synchronous>, transform_indices = @transform_16, window_bounds = array<i64: 1, 32>}, {pipeline_mode = #tpu.pipeline_mode<synchronous>, transform_indices = @transform_17, window_bounds = array<i64: 1, 32>}, {pipeline_mode = #tpu.pipeline_mode<synchronous>, transform_indices = @transform_18, window_bounds = array<i64: 32, 32>}]} {
    %c0_i32 = arith.constant 0 : i32
    %0 = arith.cmpi eq, %arg0, %c0_i32 : i32
    %1 = arith.extui %0 : i1 to i32
    %c0_i32_0 = arith.constant 0 : i32
    %2 = arith.cmpi ne, %1, %c0_i32_0 : i32
    scf.if %2 {
      %c0_83 = arith.constant 0 : index
      %c0_84 = arith.constant 0 : index
      %249 = vector.load %arg1[%c0_83, %c0_84] : memref<32x64xf32, #tpu.memory_space<vmem>>, vector<32x64xf32>
      %c0_85 = arith.constant 0 : index
      %c0_86 = arith.constant 0 : index
      %250 = vector.load %arg3[%c0_85, %c0_86] : memref<64x32xf32, #tpu.memory_space<vmem>>, vector<64x32xf32>
      %cst_87 = arith.constant dense<0.000000e+00> : vector<32x32xf32>
      %251 = tpu.matmul %249, %250, %cst_87 {dimension_numbers = #tpu.dot_dimension_numbers<[1], [0], [0], [1], [0, 0, 1, 1], [], []>} : vector<32x64xf32>, vector<64x32xf32>, vector<32x32xf32> -> vector<32x32xf32>
      %c0_88 = arith.constant 0 : index
      %c0_89 = arith.constant 0 : index
      %252 = vector.load %arg4[%c0_88, %c0_89] : memref<1x32xf32, #tpu.memory_space<vmem>>, vector<1x32xf32>
      %253 = vector.broadcast %252 : vector<1x32xf32> to vector<32x32xf32>
      %254 = arith.addf %251, %253 : vector<32x32xf32>
      %c0_90 = arith.constant 0 : index
      %c0_91 = arith.constant 0 : index
      %255 = vector.load %arg2[%c0_90, %c0_91] : memref<32x1xf32, #tpu.memory_space<vmem>>, vector<32x1xf32>
      %256 = vector.broadcast %255 : vector<32x1xf32> to vector<32x32xf32>
      %257 = arith.mulf %254, %256 : vector<32x32xf32>
      %c0_92 = arith.constant 0 : index
      %c0_93 = arith.constant 0 : index
      %258 = vector.load %arg20[%c0_92, %c0_93] : memref<32x32xf32, #tpu.memory_space<vmem>>, vector<32x32xf32>
      tpu.vector_store %arg20[%c0_92, %c0_93], %257 {strides = array<i32>} : memref<32x32xf32, #tpu.memory_space<vmem>>, vector<32x32xf32>,
    } else {
    }
    %c0 = arith.constant 0 : index
    %c0_1 = arith.constant 0 : index
    %3 = vector.load %arg20[%c0, %c0_1] : memref<32x32xf32, #tpu.memory_space<vmem>>, vector<32x32xf32>
    %c0_2 = arith.constant 0 : index
    %c0_3 = arith.constant 0 : index
    %c0_4 = arith.constant 0 : index
    %4 = vector.load %arg5[%c0_2, %c0_3, %c0_4] : memref<1x1x32xf32, #tpu.memory_space<vmem>>, vector<1x1x32xf32>
    %5 = vector.shape_cast %4 : vector<1x1x32xf32> to vector<1x32xf32>
    %c0_5 = arith.constant 0 : index
    %c0_6 = arith.constant 0 : index
    %c0_7 = arith.constant 0 : index
    %6 = vector.load %arg6[%c0_5, %c0_6, %c0_7] : memref<1x1x32xf32, #tpu.memory_space<vmem>>, vector<1x1x32xf32>
    %7 = vector.shape_cast %6 : vector<1x1x32xf32> to vector<1x32xf32>
    %cst = arith.constant dense<0.000000e+00> : vector<32xf32>
    %8 = vector.multi_reduction <add>, %3, %cst [1] : vector<32x32xf32> to vector<32xf32>
    %9 = vector.shape_cast %8 : vector<32xf32> to vector<32x1xf32>
    %cst_8 = arith.constant 3.200000e+01 : f32
    %10 = vector.broadcast %cst_8 : f32 to vector<32x1xf32>
    %11 = arith.divf %9, %10 : vector<32x1xf32>
    %12 = vector.broadcast %11 : vector<32x1xf32> to vector<32x32xf32>
    %13 = arith.subf %3, %12 : vector<32x32xf32>
    %14 = arith.mulf %13, %13 : vector<32x32xf32>
    %cst_9 = arith.constant dense<0.000000e+00> : vector<32xf32>
    %15 = vector.multi_reduction <add>, %14, %cst_9 [1] : vector<32x32xf32> to vector<32xf32>
    %16 = vector.shape_cast %15 : vector<32xf32> to vector<32x1xf32>
    %cst_10 = arith.constant 3.200000e+01 : f32
    %17 = vector.broadcast %cst_10 : f32 to vector<32x1xf32>
    %18 = arith.divf %16, %17 : vector<32x1xf32>
    %19 = vector.broadcast %11 : vector<32x1xf32> to vector<32x32xf32>
    %20 = arith.subf %3, %19 : vector<32x32xf32>
    %cst_11 = arith.constant 9.99999974E-6 : f32
    %21 = vector.broadcast %cst_11 : f32 to vector<32x1xf32>
    %22 = arith.addf %18, %21 : vector<32x1xf32>
    %23 = math.rsqrt %22 : vector<32x1xf32>
    %24 = vector.broadcast %23 : vector<32x1xf32> to vector<32x32xf32>
    %25 = arith.mulf %20, %24 : vector<32x32xf32>
    %26 = vector.broadcast %5 : vector<1x32xf32> to vector<32x32xf32>
    %27 = arith.mulf %25, %26 : vector<32x32xf32>
    %28 = vector.broadcast %7 : vector<1x32xf32> to vector<32x32xf32>
    %29 = arith.addf %27, %28 : vector<32x32xf32>
    %c0_12 = arith.constant 0 : index
    %c0_13 = arith.constant 0 : index
    %c0_14 = arith.constant 0 : index
    %30 = vector.load %arg7[%c0_12, %c0_13, %c0_14] : memref<1x32x96xf32, #tpu.memory_space<vmem>>, vector<1x32x96xf32>
    %31 = vector.shape_cast %30 : vector<1x32x96xf32> to vector<32x96xf32>
    %cst_15 = arith.constant dense<0.000000e+00> : vector<32x96xf32>
    %32 = tpu.matmul %29, %31, %cst_15 {dimension_numbers = #tpu.dot_dimension_numbers<[1], [0], [0], [1], [0, 0, 1, 1], [], []>} : vector<32x32xf32>, vector<32x96xf32>, vector<32x96xf32> -> vector<32x96xf32>
    %c0_16 = arith.constant 0 : index
    %c0_17 = arith.constant 0 : index
    %c0_18 = arith.constant 0 : index
    %33 = vector.load %arg8[%c0_16, %c0_17, %c0_18] : memref<1x1x96xf32, #tpu.memory_space<vmem>>, vector<1x1x96xf32>
    %34 = vector.shape_cast %33 : vector<1x1x96xf32> to vector<1x96xf32>
    %35 = vector.broadcast %34 : vector<1x96xf32> to vector<32x96xf32>
    %36 = arith.addf %32, %35 : vector<32x96xf32>
    %37 = vector.extract_strided_slice %36 {offsets = [0, 0], sizes = [32, 32], strides = [1, 1]} : vector<32x96xf32> to vector<32x32xf32>
    %cst_19 = arith.constant 0.353553385 : f32
    %38 = vector.broadcast %cst_19 : f32 to vector<32x32xf32>
    %39 = arith.mulf %37, %38 : vector<32x32xf32>
    %40 = vector.extract_strided_slice %36 {offsets = [0, 32], sizes = [32, 32], strides = [1, 1]} : vector<32x96xf32> to vector<32x32xf32>
    %41 = vector.extract_strided_slice %36 {offsets = [0, 64], sizes = [32, 32], strides = [1, 1]} : vector<32x96xf32> to vector<32x32xf32>
    %42 = vector.extract_strided_slice %40 {offsets = [16, 0], sizes = [16, 32], strides = [1, 1]} : vector<32x32xf32> to vector<16x32xf32>
    %43 = vector.extract_strided_slice %40 {offsets = [0, 0], sizes = [16, 32], strides = [1, 1]} : vector<32x32xf32> to vector<16x32xf32>
    %44 = tpu.concatenate %42, %43 in 0 : vector<16x32xf32>, vector<16x32xf32> -> vector<32x32xf32>
    %45 = vector.extract_strided_slice %41 {offsets = [16, 0], sizes = [16, 32], strides = [1, 1]} : vector<32x32xf32> to vector<16x32xf32>
    %46 = vector.extract_strided_slice %41 {offsets = [0, 0], sizes = [16, 32], strides = [1, 1]} : vector<32x32xf32> to vector<16x32xf32>
    %47 = tpu.concatenate %45, %46 in 0 : vector<16x32xf32>, vector<16x32xf32> -> vector<32x32xf32>
    %48 = vector.extract_strided_slice %39 {offsets = [0, 0], sizes = [32, 8], strides = [1, 1]} : vector<32x32xf32> to vector<32x8xf32>
    %49 = vector.extract_strided_slice %40 {offsets = [0, 0], sizes = [32, 8], strides = [1, 1]} : vector<32x32xf32> to vector<32x8xf32>
    %50 = arith.mulf %48, %49 : vector<32x8xf32>
    %cst_20 = arith.constant dense<0.000000e+00> : vector<32xf32>
    %51 = vector.multi_reduction <add>, %50, %cst_20 [1] : vector<32x8xf32> to vector<32xf32>
    %52 = vector.shape_cast %51 : vector<32xf32> to vector<32x1xf32>
    %53 = vector.extract_strided_slice %44 {offsets = [0, 0], sizes = [32, 8], strides = [1, 1]} : vector<32x32xf32> to vector<32x8xf32>
    %54 = arith.mulf %48, %53 : vector<32x8xf32>
    %cst_21 = arith.constant dense<0.000000e+00> : vector<32xf32>
    %55 = vector.multi_reduction <add>, %54, %cst_21 [1] : vector<32x8xf32> to vector<32xf32>
    %56 = vector.shape_cast %55 : vector<32xf32> to vector<32x1xf32>
    %57 = arith.maximumf %52, %56 : vector<32x1xf32>
    %58 = arith.subf %52, %57 : vector<32x1xf32>
    %59 = math.exp %58 : vector<32x1xf32>
    %60 = arith.subf %56, %57 : vector<32x1xf32>
    %61 = math.exp %60 : vector<32x1xf32>
    %62 = arith.addf %59, %61 : vector<32x1xf32>
    %cst_22 = arith.constant 1.000000e+00 : f32
    %63 = vector.broadcast %cst_22 : f32 to vector<32x1xf32>
    %64 = arith.divf %63, %62 : vector<32x1xf32>
    %65 = arith.mulf %59, %64 : vector<32x1xf32>
    %66 = vector.extract_strided_slice %41 {offsets = [0, 0], sizes = [32, 8], strides = [1, 1]} : vector<32x32xf32> to vector<32x8xf32>
    %67 = vector.broadcast %65 : vector<32x1xf32> to vector<32x8xf32>
    %68 = arith.mulf %67, %66 : vector<32x8xf32>
    %69 = arith.mulf %61, %64 : vector<32x1xf32>
    %70 = vector.extract_strided_slice %47 {offsets = [0, 0], sizes = [32, 8], strides = [1, 1]} : vector<32x32xf32> to vector<32x8xf32>
    %71 = vector.broadcast %69 : vector<32x1xf32> to vector<32x8xf32>
    %72 = arith.mulf %71, %70 : vector<32x8xf32>
    %73 = arith.addf %68, %72 : vector<32x8xf32>
    %74 = vector.extract_strided_slice %39 {offsets = [0, 8], sizes = [32, 8], strides = [1, 1]} : vector<32x32xf32> to vector<32x8xf32>
    %75 = vector.extract_strided_slice %40 {offsets = [0, 8], sizes = [32, 8], strides = [1, 1]} : vector<32x32xf32> to vector<32x8xf32>
    %76 = arith.mulf %74, %75 : vector<32x8xf32>
    %cst_23 = arith.constant dense<0.000000e+00> : vector<32xf32>
    %77 = vector.multi_reduction <add>, %76, %cst_23 [1] : vector<32x8xf32> to vector<32xf32>
    %78 = vector.shape_cast %77 : vector<32xf32> to vector<32x1xf32>
    %79 = vector.extract_strided_slice %44 {offsets = [0, 8], sizes = [32, 8], strides = [1, 1]} : vector<32x32xf32> to vector<32x8xf32>
    %80 = arith.mulf %74, %79 : vector<32x8xf32>
    %cst_24 = arith.constant dense<0.000000e+00> : vector<32xf32>
    %81 = vector.multi_reduction <add>, %80, %cst_24 [1] : vector<32x8xf32> to vector<32xf32>
    %82 = vector.shape_cast %81 : vector<32xf32> to vector<32x1xf32>
    %83 = arith.maximumf %78, %82 : vector<32x1xf32>
    %84 = arith.subf %78, %83 : vector<32x1xf32>
    %85 = math.exp %84 : vector<32x1xf32>
    %86 = arith.subf %82, %83 : vector<32x1xf32>
    %87 = math.exp %86 : vector<32x1xf32>
    %88 = arith.addf %85, %87 : vector<32x1xf32>
    %cst_25 = arith.constant 1.000000e+00 : f32
    %89 = vector.broadcast %cst_25 : f32 to vector<32x1xf32>
    %90 = arith.divf %89, %88 : vector<32x1xf32>
    %91 = arith.mulf %85, %90 : vector<32x1xf32>
    %92 = vector.extract_strided_slice %41 {offsets = [0, 8], sizes = [32, 8], strides = [1, 1]} : vector<32x32xf32> to vector<32x8xf32>
    %93 = vector.broadcast %91 : vector<32x1xf32> to vector<32x8xf32>
    %94 = arith.mulf %93, %92 : vector<32x8xf32>
    %95 = arith.mulf %87, %90 : vector<32x1xf32>
    %96 = vector.extract_strided_slice %47 {offsets = [0, 8], sizes = [32, 8], strides = [1, 1]} : vector<32x32xf32> to vector<32x8xf32>
    %97 = vector.broadcast %95 : vector<32x1xf32> to vector<32x8xf32>
    %98 = arith.mulf %97, %96 : vector<32x8xf32>
    %99 = arith.addf %94, %98 : vector<32x8xf32>
    %100 = vector.extract_strided_slice %39 {offsets = [0, 16], sizes = [32, 8], strides = [1, 1]} : vector<32x32xf32> to vector<32x8xf32>
    %101 = vector.extract_strided_slice %40 {offsets = [0, 16], sizes = [32, 8], strides = [1, 1]} : vector<32x32xf32> to vector<32x8xf32>
    %102 = arith.mulf %100, %101 : vector<32x8xf32>
    %cst_26 = arith.constant dense<0.000000e+00> : vector<32xf32>
    %103 = vector.multi_reduction <add>, %102, %cst_26 [1] : vector<32x8xf32> to vector<32xf32>
    %104 = vector.shape_cast %103 : vector<32xf32> to vector<32x1xf32>
    %105 = vector.extract_strided_slice %44 {offsets = [0, 16], sizes = [32, 8], strides = [1, 1]} : vector<32x32xf32> to vector<32x8xf32>
    %106 = arith.mulf %100, %105 : vector<32x8xf32>
    %cst_27 = arith.constant dense<0.000000e+00> : vector<32xf32>
    %107 = vector.multi_reduction <add>, %106, %cst_27 [1] : vector<32x8xf32> to vector<32xf32>
    %108 = vector.shape_cast %107 : vector<32xf32> to vector<32x1xf32>
    %109 = arith.maximumf %104, %108 : vector<32x1xf32>
    %110 = arith.subf %104, %109 : vector<32x1xf32>
    %111 = math.exp %110 : vector<32x1xf32>
    %112 = arith.subf %108, %109 : vector<32x1xf32>
    %113 = math.exp %112 : vector<32x1xf32>
    %114 = arith.addf %111, %113 : vector<32x1xf32>
    %cst_28 = arith.constant 1.000000e+00 : f32
    %115 = vector.broadcast %cst_28 : f32 to vector<32x1xf32>
    %116 = arith.divf %115, %114 : vector<32x1xf32>
    %117 = arith.mulf %111, %116 : vector<32x1xf32>
    %118 = vector.extract_strided_slice %41 {offsets = [0, 16], sizes = [32, 8], strides = [1, 1]} : vector<32x32xf32> to vector<32x8xf32>
    %119 = vector.broadcast %117 : vector<32x1xf32> to vector<32x8xf32>
    %120 = arith.mulf %119, %118 : vector<32x8xf32>
    %121 = arith.mulf %113, %116 : vector<32x1xf32>
    %122 = vector.extract_strided_slice %47 {offsets = [0, 16], sizes = [32, 8], strides = [1, 1]} : vector<32x32xf32> to vector<32x8xf32>
    %123 = vector.broadcast %121 : vector<32x1xf32> to vector<32x8xf32>
    %124 = arith.mulf %123, %122 : vector<32x8xf32>
    %125 = arith.addf %120, %124 : vector<32x8xf32>
    %126 = vector.extract_strided_slice %39 {offsets = [0, 24], sizes = [32, 8], strides = [1, 1]} : vector<32x32xf32> to vector<32x8xf32>
    %127 = vector.extract_strided_slice %40 {offsets = [0, 24], sizes = [32, 8], strides = [1, 1]} : vector<32x32xf32> to vector<32x8xf32>
    %128 = arith.mulf %126, %127 : vector<32x8xf32>
    %cst_29 = arith.constant dense<0.000000e+00> : vector<32xf32>
    %129 = vector.multi_reduction <add>, %128, %cst_29 [1] : vector<32x8xf32> to vector<32xf32>
    %130 = vector.shape_cast %129 : vector<32xf32> to vector<32x1xf32>
    %131 = vector.extract_strided_slice %44 {offsets = [0, 24], sizes = [32, 8], strides = [1, 1]} : vector<32x32xf32> to vector<32x8xf32>
    %132 = arith.mulf %126, %131 : vector<32x8xf32>
    %cst_30 = arith.constant dense<0.000000e+00> : vector<32xf32>
    %133 = vector.multi_reduction <add>, %132, %cst_30 [1] : vector<32x8xf32> to vector<32xf32>
    %134 = vector.shape_cast %133 : vector<32xf32> to vector<32x1xf32>
    %135 = arith.maximumf %130, %134 : vector<32x1xf32>
    %136 = arith.subf %130, %135 : vector<32x1xf32>
    %137 = math.exp %136 : vector<32x1xf32>
    %138 = arith.subf %134, %135 : vector<32x1xf32>
    %139 = math.exp %138 : vector<32x1xf32>
    %140 = arith.addf %137, %139 : vector<32x1xf32>
    %cst_31 = arith.constant 1.000000e+00 : f32
    %141 = vector.broadcast %cst_31 : f32 to vector<32x1xf32>
    %142 = arith.divf %141, %140 : vector<32x1xf32>
    %143 = arith.mulf %137, %142 : vector<32x1xf32>
    %144 = vector.extract_strided_slice %41 {offsets = [0, 24], sizes = [32, 8], strides = [1, 1]} : vector<32x32xf32> to vector<32x8xf32>
    %145 = vector.broadcast %143 : vector<32x1xf32> to vector<32x8xf32>
    %146 = arith.mulf %145, %144 : vector<32x8xf32>
    %147 = arith.mulf %139, %142 : vector<32x1xf32>
    %148 = vector.extract_strided_slice %47 {offsets = [0, 24], sizes = [32, 8], strides = [1, 1]} : vector<32x32xf32> to vector<32x8xf32>
    %149 = vector.broadcast %147 : vector<32x1xf32> to vector<32x8xf32>
    %150 = arith.mulf %149, %148 : vector<32x8xf32>
    %151 = arith.addf %146, %150 : vector<32x8xf32>
    %152 = tpu.concatenate %73, %99, %125, %151 in 1 : vector<32x8xf32>, vector<32x8xf32>, vector<32x8xf32>, vector<32x8xf32> -> vector<32x32xf32>
    %c0_32 = arith.constant 0 : index
    %c0_33 = arith.constant 0 : index
    %c0_34 = arith.constant 0 : index
    %153 = vector.load %arg9[%c0_32, %c0_33, %c0_34] : memref<1x32x32xf32, #tpu.memory_space<vmem>>, vector<1x32x32xf32>
    %154 = vector.shape_cast %153 : vector<1x32x32xf32> to vector<32x32xf32>
    %cst_35 = arith.constant dense<0.000000e+00> : vector<32x32xf32>
    %155 = tpu.matmul %152, %154, %cst_35 {dimension_numbers = #tpu.dot_dimension_numbers<[1], [0], [0], [1], [0, 0, 1, 1], [], []>} : vector<32x32xf32>, vector<32x32xf32>, vector<32x32xf32> -> vector<32x32xf32>
    %156 = arith.addf %3, %155 : vector<32x32xf32>
    %c0_36 = arith.constant 0 : index
    %c0_37 = arith.constant 0 : index
    %c0_38 = arith.constant 0 : index
    %157 = vector.load %arg10[%c0_36, %c0_37, %c0_38] : memref<1x1x32xf32, #tpu.memory_space<vmem>>, vector<1x1x32xf32>
    %158 = vector.shape_cast %157 : vector<1x1x32xf32> to vector<1x32xf32>
    %159 = vector.broadcast %158 : vector<1x32xf32> to vector<32x32xf32>
    %160 = arith.addf %156, %159 : vector<32x32xf32>
    %c0_39 = arith.constant 0 : index
    %c0_40 = arith.constant 0 : index
    %c0_41 = arith.constant 0 : index
    %161 = vector.load %arg11[%c0_39, %c0_40, %c0_41] : memref<1x1x32xf32, #tpu.memory_space<vmem>>, vector<1x1x32xf32>
    %162 = vector.shape_cast %161 : vector<1x1x32xf32> to vector<1x32xf32>
    %c0_42 = arith.constant 0 : index
    %c0_43 = arith.constant 0 : index
    %c0_44 = arith.constant 0 : index
    %163 = vector.load %arg12[%c0_42, %c0_43, %c0_44] : memref<1x1x32xf32, #tpu.memory_space<vmem>>, vector<1x1x32xf32>
    %164 = vector.shape_cast %163 : vector<1x1x32xf32> to vector<1x32xf32>
    %cst_45 = arith.constant dense<0.000000e+00> : vector<32xf32>
    %165 = vector.multi_reduction <add>, %160, %cst_45 [1] : vector<32x32xf32> to vector<32xf32>
    %166 = vector.shape_cast %165 : vector<32xf32> to vector<32x1xf32>
    %cst_46 = arith.constant 3.200000e+01 : f32
    %167 = vector.broadcast %cst_46 : f32 to vector<32x1xf32>
    %168 = arith.divf %166, %167 : vector<32x1xf32>
    %169 = vector.broadcast %168 : vector<32x1xf32> to vector<32x32xf32>
    %170 = arith.subf %160, %169 : vector<32x32xf32>
    %171 = arith.mulf %170, %170 : vector<32x32xf32>
    %cst_47 = arith.constant dense<0.000000e+00> : vector<32xf32>
    %172 = vector.multi_reduction <add>, %171, %cst_47 [1] : vector<32x32xf32> to vector<32xf32>
    %173 = vector.shape_cast %172 : vector<32xf32> to vector<32x1xf32>
    %cst_48 = arith.constant 3.200000e+01 : f32
    %174 = vector.broadcast %cst_48 : f32 to vector<32x1xf32>
    %175 = arith.divf %173, %174 : vector<32x1xf32>
    %176 = vector.broadcast %168 : vector<32x1xf32> to vector<32x32xf32>
    %177 = arith.subf %160, %176 : vector<32x32xf32>
    %cst_49 = arith.constant 9.99999974E-6 : f32
    %178 = vector.broadcast %cst_49 : f32 to vector<32x1xf32>
    %179 = arith.addf %175, %178 : vector<32x1xf32>
    %180 = math.rsqrt %179 : vector<32x1xf32>
    %181 = vector.broadcast %180 : vector<32x1xf32> to vector<32x32xf32>
    %182 = arith.mulf %177, %181 : vector<32x32xf32>
    %183 = vector.broadcast %162 : vector<1x32xf32> to vector<32x32xf32>
    %184 = arith.mulf %182, %183 : vector<32x32xf32>
    %185 = vector.broadcast %164 : vector<1x32xf32> to vector<32x32xf32>
    %186 = arith.addf %184, %185 : vector<32x32xf32>
    %c0_50 = arith.constant 0 : index
    %c0_51 = arith.constant 0 : index
    %c0_52 = arith.constant 0 : index
    %187 = vector.load %arg13[%c0_50, %c0_51, %c0_52] : memref<1x32x64xf32, #tpu.memory_space<vmem>>, vector<1x32x64xf32>
    %188 = vector.shape_cast %187 : vector<1x32x64xf32> to vector<32x64xf32>
    %cst_53 = arith.constant dense<0.000000e+00> : vector<32x64xf32>
    %189 = tpu.matmul %186, %188, %cst_53 {dimension_numbers = #tpu.dot_dimension_numbers<[1], [0], [0], [1], [0, 0, 1, 1], [], []>} : vector<32x32xf32>, vector<32x64xf32>, vector<32x64xf32> -> vector<32x64xf32>
    %c0_54 = arith.constant 0 : index
    %c0_55 = arith.constant 0 : index
    %c0_56 = arith.constant 0 : index
    %190 = vector.load %arg14[%c0_54, %c0_55, %c0_56] : memref<1x1x64xf32, #tpu.memory_space<vmem>>, vector<1x1x64xf32>
    %191 = vector.shape_cast %190 : vector<1x1x64xf32> to vector<1x64xf32>
    %192 = vector.broadcast %191 : vector<1x64xf32> to vector<32x64xf32>
    %193 = arith.addf %189, %192 : vector<32x64xf32>
    %cst_57 = arith.constant 5.000000e-01 : f32
    %194 = vector.broadcast %cst_57 : f32 to vector<32x64xf32>
    %195 = arith.mulf %194, %193 : vector<32x64xf32>
    %cst_58 = arith.constant 0.707106769 : f32
    %196 = vector.broadcast %cst_58 : f32 to vector<32x64xf32>
    %197 = arith.mulf %193, %196 : vector<32x64xf32>
    %cst_59 = arith.constant 0.000000e+00 : f32
    %198 = vector.broadcast %cst_59 : f32 to vector<32x64xf32>
    %199 = arith.cmpf olt, %197, %198 : vector<32x64xf32>
    %cst_60 = arith.constant -1.000000e+00 : f32
    %cst_61 = arith.constant 1.000000e+00 : f32
    %200 = vector.broadcast %cst_60 : f32 to vector<32x64xf32>
    %201 = vector.broadcast %cst_61 : f32 to vector<32x64xf32>
    %202 = arith.select %199, %200, %201 : vector<32x64xi1>, vector<32x64xf32>
    %203 = math.absf %197 : vector<32x64xf32>
    %cst_62 = arith.constant 0.327591091 : f32
    %204 = vector.broadcast %cst_62 : f32 to vector<32x64xf32>
    %205 = arith.mulf %204, %203 : vector<32x64xf32>
    %cst_63 = arith.constant 1.000000e+00 : f32
    %206 = vector.broadcast %cst_63 : f32 to vector<32x64xf32>
    %207 = arith.addf %206, %205 : vector<32x64xf32>
    %cst_64 = arith.constant 1.000000e+00 : f32
    %208 = vector.broadcast %cst_64 : f32 to vector<32x64xf32>
    %209 = arith.divf %208, %207 : vector<32x64xf32>
    %cst_65 = arith.constant 1.06140542 : f32
    %210 = vector.broadcast %cst_65 : f32 to vector<32x64xf32>
    %211 = arith.mulf %210, %209 : vector<32x64xf32>
    %cst_66 = arith.constant -1.45315206 : f32
    %212 = vector.broadcast %cst_66 : f32 to vector<32x64xf32>
    %213 = arith.addf %211, %212 : vector<32x64xf32>
    %214 = arith.mulf %213, %209 : vector<32x64xf32>
    %cst_67 = arith.constant 1.42141378 : f32
    %215 = vector.broadcast %cst_67 : f32 to vector<32x64xf32>
    %216 = arith.addf %214, %215 : vector<32x64xf32>
    %217 = arith.mulf %216, %209 : vector<32x64xf32>
    %cst_68 = arith.constant -0.284496725 : f32
    %218 = vector.broadcast %cst_68 : f32 to vector<32x64xf32>
    %219 = arith.addf %217, %218 : vector<32x64xf32>
    %220 = arith.mulf %219, %209 : vector<32x64xf32>
    %cst_69 = arith.constant 0.254829586 : f32
    %221 = vector.broadcast %cst_69 : f32 to vector<32x64xf32>
    %222 = arith.addf %220, %221 : vector<32x64xf32>
    %223 = arith.mulf %222, %209 : vector<32x64xf32>
    %cst_70 = arith.constant 0.000000e+00 : f32
    %224 = vector.broadcast %cst_70 : f32 to vector<32x64xf32>
    %225 = arith.subf %224, %203 : vector<32x64xf32>
    %226 = arith.mulf %225, %203 : vector<32x64xf32>
    %227 = math.exp %226 : vector<32x64xf32>
    %228 = arith.mulf %223, %227 : vector<32x64xf32>
    %cst_71 = arith.constant 1.000000e+00 : f32
    %229 = vector.broadcast %cst_71 : f32 to vector<32x64xf32>
    %230 = arith.subf %229, %228 : vector<32x64xf32>
    %231 = arith.mulf %202, %230 : vector<32x64xf32>
    %cst_72 = arith.constant 1.000000e+00 : f32
    %232 = vector.broadcast %cst_72 : f32 to vector<32x64xf32>
    %233 = arith.addf %232, %231 : vector<32x64xf32>
    %234 = arith.mulf %195, %233 : vector<32x64xf32>
    %c0_73 = arith.constant 0 : index
    %c0_74 = arith.constant 0 : index
    %c0_75 = arith.constant 0 : index
    %235 = vector.load %arg15[%c0_73, %c0_74, %c0_75] : memref<1x64x32xf32, #tpu.memory_space<vmem>>, vector<1x64x32xf32>
    %236 = vector.shape_cast %235 : vector<1x64x32xf32> to vector<64x32xf32>
    %cst_76 = arith.constant dense<0.000000e+00> : vector<32x32xf32>
    %237 = tpu.matmul %234, %236, %cst_76 {dimension_numbers = #tpu.dot_dimension_numbers<[1], [0], [0], [1], [0, 0, 1, 1], [], []>} : vector<32x64xf32>, vector<64x32xf32>, vector<32x32xf32> -> vector<32x32xf32>
    %238 = arith.addf %160, %237 : vector<32x32xf32>
    %c0_77 = arith.constant 0 : index
    %c0_78 = arith.constant 0 : index
    %c0_79 = arith.constant 0 : index
    %239 = vector.load %arg16[%c0_77, %c0_78, %c0_79] : memref<1x1x32xf32, #tpu.memory_space<vmem>>, vector<1x1x32xf32>
    %240 = vector.shape_cast %239 : vector<1x1x32xf32> to vector<1x32xf32>
    %241 = vector.broadcast %240 : vector<1x32xf32> to vector<32x32xf32>
    %242 = arith.addf %238, %241 : vector<32x32xf32>
    %c1_i32 = arith.constant 1 : i32
    %243 = arith.cmpi slt, %arg0, %c1_i32 : i32
    %244 = arith.extui %243 : i1 to i32
    %c0_i32_80 = arith.constant 0 : i32
    %245 = arith.cmpi ne, %244, %c0_i32_80 : i32
    scf.if %245 {
      %c0_83 = arith.constant 0 : index
      %c0_84 = arith.constant 0 : index
      %249 = vector.load %arg20[%c0_83, %c0_84] : memref<32x32xf32, #tpu.memory_space<vmem>>, vector<32x32xf32>
      tpu.vector_store %arg20[%c0_83, %c0_84], %242 {strides = array<i32>} : memref<32x32xf32, #tpu.memory_space<vmem>>, vector<32x32xf32>,
    } else {
    }
    %c1_i32_81 = arith.constant 1 : i32
    %246 = arith.cmpi eq, %arg0, %c1_i32_81 : i32
    %247 = arith.extui %246 : i1 to i32
    %c0_i32_82 = arith.constant 0 : i32
    %248 = arith.cmpi ne, %247, %c0_i32_82 : i32
    scf.if %248 {
      %c0_83 = arith.constant 0 : index
      %c0_84 = arith.constant 0 : index
      %249 = vector.load %arg17[%c0_83, %c0_84] : memref<1x32xf32, #tpu.memory_space<vmem>>, vector<1x32xf32>
      %c0_85 = arith.constant 0 : index
      %c0_86 = arith.constant 0 : index
      %250 = vector.load %arg18[%c0_85, %c0_86] : memref<1x32xf32, #tpu.memory_space<vmem>>, vector<1x32xf32>
      %cst_87 = arith.constant dense<0.000000e+00> : vector<32xf32>
      %251 = vector.multi_reduction <add>, %242, %cst_87 [1] : vector<32x32xf32> to vector<32xf32>
      %252 = vector.shape_cast %251 : vector<32xf32> to vector<32x1xf32>
      %cst_88 = arith.constant 3.200000e+01 : f32
      %253 = vector.broadcast %cst_88 : f32 to vector<32x1xf32>
      %254 = arith.divf %252, %253 : vector<32x1xf32>
      %255 = vector.broadcast %254 : vector<32x1xf32> to vector<32x32xf32>
      %256 = arith.subf %242, %255 : vector<32x32xf32>
      %257 = arith.mulf %256, %256 : vector<32x32xf32>
      %cst_89 = arith.constant dense<0.000000e+00> : vector<32xf32>
      %258 = vector.multi_reduction <add>, %257, %cst_89 [1] : vector<32x32xf32> to vector<32xf32>
      %259 = vector.shape_cast %258 : vector<32xf32> to vector<32x1xf32>
      %cst_90 = arith.constant 3.200000e+01 : f32
      %260 = vector.broadcast %cst_90 : f32 to vector<32x1xf32>
      %261 = arith.divf %259, %260 : vector<32x1xf32>
      %262 = vector.broadcast %254 : vector<32x1xf32> to vector<32x32xf32>
      %263 = arith.subf %242, %262 : vector<32x32xf32>
      %cst_91 = arith.constant 9.99999974E-6 : f32
      %264 = vector.broadcast %cst_91 : f32 to vector<32x1xf32>
      %265 = arith.addf %261, %264 : vector<32x1xf32>
      %266 = math.rsqrt %265 : vector<32x1xf32>
      %267 = vector.broadcast %266 : vector<32x1xf32> to vector<32x32xf32>
      %268 = arith.mulf %263, %267 : vector<32x32xf32>
      %269 = vector.broadcast %249 : vector<1x32xf32> to vector<32x32xf32>
      %270 = arith.mulf %268, %269 : vector<32x32xf32>
      %271 = vector.broadcast %250 : vector<1x32xf32> to vector<32x32xf32>
      %272 = arith.addf %270, %271 : vector<32x32xf32>
      %c0_92 = arith.constant 0 : index
      %c0_93 = arith.constant 0 : index
      %273 = vector.load %arg19[%c0_92, %c0_93] : memref<32x32xf32, #tpu.memory_space<vmem>>, vector<32x32xf32>
      tpu.vector_store %arg19[%c0_92, %c0_93], %272 {strides = array<i32>} : memref<32x32xf32, #tpu.memory_space<vmem>>, vector<32x32xf32>,
    } else {
    }
    return
  }
  func.func @transform_0(%arg0: i32) -> (i32, i32) {
    %c0_i32 = arith.constant 0 : i32
    %c0_i32_0 = arith.constant 0 : i32
    %c0_i32_1 = arith.constant 0 : i32
    return %c0_i32, %c0_i32_0 : i32, i32
  }
  func.func @transform_1(%arg0: i32) -> (i32, i32) {
    %c0_i32 = arith.constant 0 : i32
    %c0_i32_0 = arith.constant 0 : i32
    %c0_i32_1 = arith.constant 0 : i32
    return %c0_i32, %c0_i32_0 : i32, i32
  }
  func.func @transform_2(%arg0: i32) -> (i32, i32) {
    %c0_i32 = arith.constant 0 : i32
    %c0_i32_0 = arith.constant 0 : i32
    %c0_i32_1 = arith.constant 0 : i32
    return %c0_i32, %c0_i32_0 : i32, i32
  }
  func.func @transform_3(%arg0: i32) -> (i32, i32) {
    %c0_i32 = arith.constant 0 : i32
    %c0_i32_0 = arith.constant 0 : i32
    %c0_i32_1 = arith.constant 0 : i32
    return %c0_i32, %c0_i32_0 : i32, i32
  }
  func.func @transform_4(%arg0: i32) -> (i32, i32, i32) {
    %c0_i32 = arith.constant 0 : i32
    %c0_i32_0 = arith.constant 0 : i32
    %c0_i32_1 = arith.constant 0 : i32
    return %arg0, %c0_i32, %c0_i32_0 : i32, i32, i32
  }
  func.func @transform_5(%arg0: i32) -> (i32, i32, i32) {
    %c0_i32 = arith.constant 0 : i32
    %c0_i32_0 = arith.constant 0 : i32
    %c0_i32_1 = arith.constant 0 : i32
    return %arg0, %c0_i32, %c0_i32_0 : i32, i32, i32
  }
  func.func @transform_6(%arg0: i32) -> (i32, i32, i32) {
    %c0_i32 = arith.constant 0 : i32
    %c0_i32_0 = arith.constant 0 : i32
    %c0_i32_1 = arith.constant 0 : i32
    return %arg0, %c0_i32, %c0_i32_0 : i32, i32, i32
  }
  func.func @transform_7(%arg0: i32) -> (i32, i32, i32) {
    %c0_i32 = arith.constant 0 : i32
    %c0_i32_0 = arith.constant 0 : i32
    %c0_i32_1 = arith.constant 0 : i32
    return %arg0, %c0_i32, %c0_i32_0 : i32, i32, i32
  }
  func.func @transform_8(%arg0: i32) -> (i32, i32, i32) {
    %c0_i32 = arith.constant 0 : i32
    %c0_i32_0 = arith.constant 0 : i32
    %c0_i32_1 = arith.constant 0 : i32
    return %arg0, %c0_i32, %c0_i32_0 : i32, i32, i32
  }
  func.func @transform_9(%arg0: i32) -> (i32, i32, i32) {
    %c0_i32 = arith.constant 0 : i32
    %c0_i32_0 = arith.constant 0 : i32
    %c0_i32_1 = arith.constant 0 : i32
    return %arg0, %c0_i32, %c0_i32_0 : i32, i32, i32
  }
  func.func @transform_10(%arg0: i32) -> (i32, i32, i32) {
    %c0_i32 = arith.constant 0 : i32
    %c0_i32_0 = arith.constant 0 : i32
    %c0_i32_1 = arith.constant 0 : i32
    return %arg0, %c0_i32, %c0_i32_0 : i32, i32, i32
  }
  func.func @transform_11(%arg0: i32) -> (i32, i32, i32) {
    %c0_i32 = arith.constant 0 : i32
    %c0_i32_0 = arith.constant 0 : i32
    %c0_i32_1 = arith.constant 0 : i32
    return %arg0, %c0_i32, %c0_i32_0 : i32, i32, i32
  }
  func.func @transform_12(%arg0: i32) -> (i32, i32, i32) {
    %c0_i32 = arith.constant 0 : i32
    %c0_i32_0 = arith.constant 0 : i32
    %c0_i32_1 = arith.constant 0 : i32
    return %arg0, %c0_i32, %c0_i32_0 : i32, i32, i32
  }
  func.func @transform_13(%arg0: i32) -> (i32, i32, i32) {
    %c0_i32 = arith.constant 0 : i32
    %c0_i32_0 = arith.constant 0 : i32
    %c0_i32_1 = arith.constant 0 : i32
    return %arg0, %c0_i32, %c0_i32_0 : i32, i32, i32
  }
  func.func @transform_14(%arg0: i32) -> (i32, i32, i32) {
    %c0_i32 = arith.constant 0 : i32
    %c0_i32_0 = arith.constant 0 : i32
    %c0_i32_1 = arith.constant 0 : i32
    return %arg0, %c0_i32, %c0_i32_0 : i32, i32, i32
  }
  func.func @transform_15(%arg0: i32) -> (i32, i32, i32) {
    %c0_i32 = arith.constant 0 : i32
    %c0_i32_0 = arith.constant 0 : i32
    %c0_i32_1 = arith.constant 0 : i32
    return %arg0, %c0_i32, %c0_i32_0 : i32, i32, i32
  }
  func.func @transform_16(%arg0: i32) -> (i32, i32) {
    %c0_i32 = arith.constant 0 : i32
    %c0_i32_0 = arith.constant 0 : i32
    %c0_i32_1 = arith.constant 0 : i32
    return %c0_i32, %c0_i32_0 : i32, i32
  }
  func.func @transform_17(%arg0: i32) -> (i32, i32) {
    %c0_i32 = arith.constant 0 : i32
    %c0_i32_0 = arith.constant 0 : i32
    %c0_i32_1 = arith.constant 0 : i32
    return %c0_i32, %c0_i32_0 : i32, i32
  }
  func.func @transform_18(%arg0: i32) -> (i32, i32) {
    %c0_i32 = arith.constant 0 : i32
    %c0_i32_0 = arith.constant 0 : i32
    %c0_i32_1 = arith.constant 0 : i32
    return %c0_i32, %c0_i32_0 : i32, i32
  }
}

</mosaic_0001>

<llo_original>
// kernel: tinyvit_forward.1
$region0: #{tinyvit_forward.1}
  #allocation0 [shape = 'u32[]', space=smem, size = 0x4, offset = 0x4, fixed_abs, tag = 'smem constant byte address 0x4 - core index']
  #allocation1 [shape = 'u32[144,128]{1,0:T(1,128)}', space=vmem, size = 0x12000, scoped, tag = 'internal scratch']
  #allocation2 [shape = 'f32[32,32]{1,0:T(8,128)}', space=vmem, size = 0x4000, scoped, tag = 'scratch operand']
  %s0 = inlined_call_operand.vmem [shape: f32[32,64], index: 0, kind: input, shape index: {}]
  %s1 = inlined_call_operand.vmem [shape: f32[32,1], index: 1, kind: input, shape index: {}]
  %s2 = inlined_call_operand.vmem [shape: f32[64,32], index: 2, kind: input, shape index: {}]
  %s3 = inlined_call_operand.vmem [shape: f32[1,32], index: 3, kind: input, shape index: {}]
  %s4 = inlined_call_operand.vmem [shape: f32[2,1,32], index: 4, kind: input, shape index: {}]
  %s5 = inlined_call_operand.vmem [shape: f32[2,1,32], index: 5, kind: input, shape index: {}]
  %s6 = inlined_call_operand.vmem [shape: f32[2,32,96], index: 6, kind: input, shape index: {}]
  %s7 = inlined_call_operand.vmem [shape: f32[2,1,96], index: 7, kind: input, shape index: {}]
  %s8 = inlined_call_operand.vmem [shape: f32[2,32,32], index: 8, kind: input, shape index: {}]
  %s9 = inlined_call_operand.vmem [shape: f32[2,1,32], index: 9, kind: input, shape index: {}]
  %s10 = inlined_call_operand.vmem [shape: f32[2,1,32], index: 10, kind: input, shape index: {}]
  %s11 = inlined_call_operand.vmem [shape: f32[2,1,32], index: 11, kind: input, shape index: {}]
  %s12 = inlined_call_operand.vmem [shape: f32[2,32,64], index: 12, kind: input, shape index: {}]
  %s13 = inlined_call_operand.vmem [shape: f32[2,1,64], index: 13, kind: input, shape index: {}]
  %s14 = inlined_call_operand.vmem [shape: f32[2,64,32], index: 14, kind: input, shape index: {}]
  %s15 = inlined_call_operand.vmem [shape: f32[2,1,32], index: 15, kind: input, shape index: {}]
  %s16 = inlined_call_operand.vmem [shape: f32[1,32], index: 16, kind: input, shape index: {}]
  %s17 = inlined_call_operand.vmem [shape: f32[1,32], index: 17, kind: input, shape index: {}]
  %s18 = inlined_call_operand.hbm [shape: f32[32,32], index: 18, kind: output, shape index: {}]
  %s19 = sld [smem:[#allocation0]]
  $region117: #{tinyvit_forward.1} parent=0
    _
  %s21 = ssub.s32 1, %s19
  %s22 = scalar_select 0, %s21, %s19
  $region1: #{tinyvit_forward.1} parent=0
    #allocation3 [shape = 'u8[16384]{0}', space=vmem, size = 0x4000, scoped, tag = 'output window, operand 0, single buffered']
    #allocation4 [shape = 's32[2]{0}', space=sflag, size = 0x8, scoped, tag = 'scoped memory for tinyvit_forward.1']
    %23 = vsyncpa [#allocation4], 0
    loop: start=0, step=1, limit=4
    $region2: #{tinyvit_forward.1} parent=1 // loop_pre_header
      _
    $region3: #{tinyvit_forward.1} parent=1 // loop_header
      %s25 = sphi 0, %s29
      %p26 = scmp.ge.s32.totalorder %s25, 4
      %s33 = sphi 0, %s33
      %s35 = sphi 0, %s33
      %s36 = sphi 0, %s35
      %s50 = sphi 0, %s36
      %s54 = sphi 0, %s54
      %s56 = sphi 0, %s54
      %s57 = sphi 0, %s56
      %s71 = sphi 0, %s57
      %s75 = sphi 0, %s75
      %s77 = sphi 0, %s75
      %s78 = sphi 0, %s77
      %s92 = sphi 0, %s78
      %s96 = sphi 0, %s96
      %s98 = sphi 0, %s96
      %s99 = sphi 0, %s98
      %s113 = sphi 0, %s99
      %s119 = sphi 0, %s121
      %s122 = sphi 0, %s119
      %s123 = sphi 0, %s122
      %s139 = sphi 0, %s123
      %s145 = sphi 0, %s147
      %s148 = sphi 0, %s145
      %s149 = sphi 0, %s148
      %s165 = sphi 0, %s149
      %s171 = sphi 0, %s173
      %s174 = sphi 0, %s171
      %s175 = sphi 0, %s174
      %s191 = sphi 0, %s175
      %s197 = sphi 0, %s199
      %s200 = sphi 0, %s197
      %s201 = sphi 0, %s200
      %s217 = sphi 0, %s201
      %s223 = sphi 0, %s225
      %s226 = sphi 0, %s223
      %s227 = sphi 0, %s226
      %s243 = sphi 0, %s227
      %s249 = sphi 0, %s251
      %s252 = sphi 0, %s249
      %s253 = sphi 0, %s252
      %s269 = sphi 0, %s253
      %s275 = sphi 0, %s277
      %s278 = sphi 0, %s275
      %s279 = sphi 0, %s278
      %s295 = sphi 0, %s279
      %s301 = sphi 0, %s303
      %s304 = sphi 0, %s301
      %s305 = sphi 0, %s304
      %s321 = sphi 0, %s305
      %s327 = sphi 0, %s329
      %s330 = sphi 0, %s327
      %s331 = sphi 0, %s330
      %s347 = sphi 0, %s331
      %s353 = sphi 0, %s355
      %s356 = sphi 0, %s353
      %s357 = sphi 0, %s356
      %s373 = sphi 0, %s357
      %s379 = sphi 0, %s381
      %s382 = sphi 0, %s379
      %s383 = sphi 0, %s382
      %s399 = sphi 0, %s383
      %s405 = sphi 0, %s407
      %s408 = sphi 0, %s405
      %s409 = sphi 0, %s408
      %s425 = sphi 0, %s409
      %s429 = sphi 0, %s429
      %s431 = sphi 0, %s429
      %s432 = sphi 0, %s431
      %s446 = sphi 0, %s432
      %s450 = sphi 0, %s450
      %s452 = sphi 0, %s450
      %s453 = sphi 0, %s452
      %s467 = sphi 0, %s453
      %s471 = sphi 0, %s471
      %s473 = sphi 0, %s471
      %s474 = sphi 0, %s473
      %s488 = sphi 0, %s474
    $region4: #{tinyvit_forward.1} parent=1 // loop_header_branch
      %28 = sbr.rel (%p26) target = $region8
    $region5: #{tinyvit_forward.1} parent=1 // loop_body
      %s30 = ssub.s32 %s25, 1
      %s31 = ssub.s32 %s25, 2
      %s32 = sadd.s32 %s25, 1
      %s34 = sadd.s32 %s33, 1
      %p37 = scmp.eq.s32.totalorder %s25, 1
      %p38 = scmp.ne.s32.totalorder %s33, %s35
      %p39 = scmp.eq.s32.totalorder %s25, 0
      %p40 = por %p38, %p39
      %p41 = scmp.ne.s32.totalorder %s33, %s35
      %p42 = scmp.eq.s32.totalorder %s30, 1
      %p43 = por %p41, %p42
      %p44 = scmp.ne.s32.totalorder %s35, %s36
      %p45 = scmp.eq.s32.totalorder %s30, 0
      %p46 = por %p44, %p45
      %p47 = scmp.ne.s32.totalorder %s35, %s36
      %p48 = scmp.eq.s32.totalorder %s31, 1
      %p49 = por %p47, %p48
      %p51 = scmp.ne.s32.totalorder %s36, %s50
      %p52 = scmp.eq.s32.totalorder %s31, 0
      %p53 = por %p51, %p52
      %s55 = sadd.s32 %s54, 1
      %p58 = scmp.eq.s32.totalorder %s25, 1
      %p59 = scmp.ne.s32.totalorder %s54, %s56
      %p60 = scmp.eq.s32.totalorder %s25, 0
      %p61 = por %p59, %p60
      %p62 = scmp.ne.s32.totalorder %s54, %s56
      %p63 = scmp.eq.s32.totalorder %s30, 1
      %p64 = por %p62, %p63
      %p65 = scmp.ne.s32.totalorder %s56, %s57
      %p66 = scmp.eq.s32.totalorder %s30, 0
      %p67 = por %p65, %p66
      %p68 = scmp.ne.s32.totalorder %s56, %s57
      %p69 = scmp.eq.s32.totalorder %s31, 1
      %p70 = por %p68, %p69
      %p72 = scmp.ne.s32.totalorder %s57, %s71
      %p73 = scmp.eq.s32.totalorder %s31, 0
      %p74 = por %p72, %p73
      %s76 = sadd.s32 %s75, 1
      %p79 = scmp.eq.s32.totalorder %s25, 1
      %p80 = scmp.ne.s32.totalorder %s75, %s77
      %p81 = scmp.eq.s32.totalorder %s25, 0
      %p82 = por %p80, %p81
      %p83 = scmp.ne.s32.totalorder %s75, %s77
      %p84 = scmp.eq.s32.totalorder %s30, 1
      %p85 = por %p83, %p84
      %p86 = scmp.ne.s32.totalorder %s77, %s78
      %p87 = scmp.eq.s32.totalorder %s30, 0
      %p88 = por %p86, %p87
      %p89 = scmp.ne.s32.totalorder %s77, %s78
      %p90 = scmp.eq.s32.totalorder %s31, 1
      %p91 = por %p89, %p90
      %p93 = scmp.ne.s32.totalorder %s78, %s92
      %p94 = scmp.eq.s32.totalorder %s31, 0
      %p95 = por %p93, %p94
      %s97 = sadd.s32 %s96, 1
      %p100 = scmp.eq.s32.totalorder %s25, 1
      %p101 = scmp.ne.s32.totalorder %s96, %s98
      %p102 = scmp.eq.s32.totalorder %s25, 0
      %p103 = por %p101, %p102
      %p104 = scmp.ne.s32.totalorder %s96, %s98
      %p105 = scmp.eq.s32.totalorder %s30, 1
      %p106 = por %p104, %p105
      %p107 = scmp.ne.s32.totalorder %s98, %s99
      %p108 = scmp.eq.s32.totalorder %s30, 0
      %p109 = por %p107, %p108
      %p110 = scmp.ne.s32.totalorder %s98, %s99
      %p111 = scmp.eq.s32.totalorder %s31, 1
      %p112 = por %p110, %p111
      %p114 = scmp.ne.s32.totalorder %s99, %s113
      %p115 = scmp.eq.s32.totalorder %s31, 0
      %p116 = por %p114, %p115
      %s117 = ssub.s32 %s25, %s32
      %p118 = scmp.eq.s32.totalorder %s117, 0
      %s120 = sadd.s32 %s119, 1
      %s121 = scalar_select %p118, %s119, %s120
      %p124 = pneg %p118
      %p125 = scmp.eq.s32.totalorder %s25, 1
      %p126 = por %p124, %p125
      %p127 = scmp.ne.s32.totalorder %s119, %s122
      %p128 = scmp.eq.s32.totalorder %s25, 0
      %p129 = por %p127, %p128
      %p130 = scmp.ne.s32.totalorder %s119, %s122
      %p131 = scmp.eq.s32.totalorder %s30, 1
      %p132 = por %p130, %p131
      %p133 = scmp.ne.s32.totalorder %s122, %s123
      %p134 = scmp.eq.s32.totalorder %s30, 0
      %p135 = por %p133, %p134
      %p136 = scmp.ne.s32.totalorder %s122, %s123
      %p137 = scmp.eq.s32.totalorder %s31, 1
      %p138 = por %p136, %p137
      %p140 = scmp.ne.s32.totalorder %s123, %s139
      %p141 = scmp.eq.s32.totalorder %s31, 0
      %p142 = por %p140, %p141
      %s143 = ssub.s32 %s25, %s32
      %p144 = scmp.eq.s32.totalorder %s143, 0
      %s146 = sadd.s32 %s145, 1
      %s147 = scalar_select %p144, %s145, %s146
      %p150 = pneg %p144
      %p151 = scmp.eq.s32.totalorder %s25, 1
      %p152 = por %p150, %p151
      %p153 = scmp.ne.s32.totalorder %s145, %s148
      %p154 = scmp.eq.s32.totalorder %s25, 0
      %p155 = por %p153, %p154
      %p156 = scmp.ne.s32.totalorder %s145, %s148
      %p157 = scmp.eq.s32.totalorder %s30, 1
      %p158 = por %p156, %p157
      %p159 = scmp.ne.s32.totalorder %s148, %s149
      %p160 = scmp.eq.s32.totalorder %s30, 0
      %p161 = por %p159, %p160
      %p162 = scmp.ne.s32.totalorder %s148, %s149
      %p163 = scmp.eq.s32.totalorder %s31, 1
      %p164 = por %p162, %p163
      %p166 = scmp.ne.s32.totalorder %s149, %s165
      %p167 = scmp.eq.s32.totalorder %s31, 0
      %p168 = por %p166, %p167
      %s169 = ssub.s32 %s25, %s32
      %p170 = scmp.eq.s32.totalorder %s169, 0
      %s172 = sadd.s32 %s171, 1
      %s173 = scalar_select %p170, %s171, %s172
      %p176 = pneg %p170
      %p177 = scmp.eq.s32.totalorder %s25, 1
      %p178 = por %p176, %p177
      %p179 = scmp.ne.s32.totalorder %s171, %s174
      %p180 = scmp.eq.s32.totalorder %s25, 0
      %p181 = por %p179, %p180
      %p182 = scmp.ne.s32.totalorder %s171, %s174
      %p183 = scmp.eq.s32.totalorder %s30, 1
      %p184 = por %p182, %p183
      %p185 = scmp.ne.s32.totalorder %s174, %s175
      %p186 = scmp.eq.s32.totalorder %s30, 0
      %p187 = por %p185, %p186
      %p188 = scmp.ne.s32.totalorder %s174, %s175
      %p189 = scmp.eq.s32.totalorder %s31, 1
      %p190 = por %p188, %p189
      %p192 = scmp.ne.s32.totalorder %s175, %s191
      %p193 = scmp.eq.s32.totalorder %s31, 0
      %p194 = por %p192, %p193
      %s195 = ssub.s32 %s25, %s32
      %p196 = scmp.eq.s32.totalorder %s195, 0
      %s198 = sadd.s32 %s197, 1
      %s199 = scalar_select %p196, %s197, %s198
      %p202 = pneg %p196
      %p203 = scmp.eq.s32.totalorder %s25, 1
      %p204 = por %p202, %p203
      %p205 = scmp.ne.s32.totalorder %s197, %s200
      %p206 = scmp.eq.s32.totalorder %s25, 0
      %p207 = por %p205, %p206
      %p208 = scmp.ne.s32.totalorder %s197, %s200
      %p209 = scmp.eq.s32.totalorder %s30, 1
      %p210 = por %p208, %p209
      %p211 = scmp.ne.s32.totalorder %s200, %s201
      %p212 = scmp.eq.s32.totalorder %s30, 0
      %p213 = por %p211, %p212
      %p214 = scmp.ne.s32.totalorder %s200, %s201
      %p215 = scmp.eq.s32.totalorder %s31, 1
      %p216 = por %p214, %p215
      %p218 = scmp.ne.s32.totalorder %s201, %s217
      %p219 = scmp.eq.s32.totalorder %s31, 0
      %p220 = por %p218, %p219
      %s221 = ssub.s32 %s25, %s32
      %p222 = scmp.eq.s32.totalorder %s221, 0
      %s224 = sadd.s32 %s223, 1
      %s225 = scalar_select %p222, %s223, %s224
      %p228 = pneg %p222
      %p229 = scmp.eq.s32.totalorder %s25, 1
      %p230 = por %p228, %p229
      %p231 = scmp.ne.s32.totalorder %s223, %s226
      %p232 = scmp.eq.s32.totalorder %s25, 0
      %p233 = por %p231, %p232
      %p234 = scmp.ne.s32.totalorder %s223, %s226
      %p235 = scmp.eq.s32.totalorder %s30, 1
      %p236 = por %p234, %p235
      %p237 = scmp.ne.s32.totalorder %s226, %s227
      %p238 = scmp.eq.s32.totalorder %s30, 0
      %p239 = por %p237, %p238
      %p240 = scmp.ne.s32.totalorder %s226, %s227
      %p241 = scmp.eq.s32.totalorder %s31, 1
      %p242 = por %p240, %p241
      %p244 = scmp.ne.s32.totalorder %s227, %s243
      %p245 = scmp.eq.s32.totalorder %s31, 0
      %p246 = por %p244, %p245
      %s247 = ssub.s32 %s25, %s32
      %p248 = scmp.eq.s32.totalorder %s247, 0
      %s250 = sadd.s32 %s249, 1
      %s251 = scalar_select %p248, %s249, %s250
      %p254 = pneg %p248
      %p255 = scmp.eq.s32.totalorder %s25, 1
      %p256 = por %p254, %p255
      %p257 = scmp.ne.s32.totalorder %s249, %s252
      %p258 = scmp.eq.s32.totalorder %s25, 0
      %p259 = por %p257, %p258
      %p260 = scmp.ne.s32.totalorder %s249, %s252
      %p261 = scmp.eq.s32.totalorder %s30, 1
      %p262 = por %p260, %p261
      %p263 = scmp.ne.s32.totalorder %s252, %s253
      %p264 = scmp.eq.s32.totalorder %s30, 0
      %p265 = por %p263, %p264
      %p266 = scmp.ne.s32.totalorder %s252, %s253
      %p267 = scmp.eq.s32.totalorder %s31, 1
      %p268 = por %p266, %p267
      %p270 = scmp.ne.s32.totalorder %s253, %s269
      %p271 = scmp.eq.s32.totalorder %s31, 0
      %p272 = por %p270, %p271
      %s273 = ssub.s32 %s25, %s32
      %p274 = scmp.eq.s32.totalorder %s273, 0
      %s276 = sadd.s32 %s275, 1
      %s277 = scalar_select %p274, %s275, %s276
      %p280 = pneg %p274
      %p281 = scmp.eq.s32.totalorder %s25, 1
      %p282 = por %p280, %p281
      %p283 = scmp.ne.s32.totalorder %s275, %s278
      %p284 = scmp.eq.s32.totalorder %s25, 0
      %p285 = por %p283, %p284
      %p286 = scmp.ne.s32.totalorder %s275, %s278
      %p287 = scmp.eq.s32.totalorder %s30, 1
      %p288 = por %p286, %p287
      %p289 = scmp.ne.s32.totalorder %s278, %s279
      %p290 = scmp.eq.s32.totalorder %s30, 0
      %p291 = por %p289, %p290
      %p292 = scmp.ne.s32.totalorder %s278, %s279
      %p293 = scmp.eq.s32.totalorder %s31, 1
      %p294 = por %p292, %p293
      %p296 = scmp.ne.s32.totalorder %s279, %s295
      %p297 = scmp.eq.s32.totalorder %s31, 0
      %p298 = por %p296, %p297
      %s299 = ssub.s32 %s25, %s32
      %p300 = scmp.eq.s32.totalorder %s299, 0
      %s302 = sadd.s32 %s301, 1
      %s303 = scalar_select %p300, %s301, %s302
      %p306 = pneg %p300
      %p307 = scmp.eq.s32.totalorder %s25, 1
      %p308 = por %p306, %p307
      %p309 = scmp.ne.s32.totalorder %s301, %s304
      %p310 = scmp.eq.s32.totalorder %s25, 0
      %p311 = por %p309, %p310
      %p312 = scmp.ne.s32.totalorder %s301, %s304
      %p313 = scmp.eq.s32.totalorder %s30, 1
      %p314 = por %p312, %p313
      %p315 = scmp.ne.s32.totalorder %s304, %s305
      %p316 = scmp.eq.s32.totalorder %s30, 0
      %p317 = por %p315, %p316
      %p318 = scmp.ne.s32.totalorder %s304, %s305
      %p319 = scmp.eq.s32.totalorder %s31, 1
      %p320 = por %p318, %p319
      %p322 = scmp.ne.s32.totalorder %s305, %s321
      %p323 = scmp.eq.s32.totalorder %s31, 0
      %p324 = por %p322, %p323
      %s325 = ssub.s32 %s25, %s32
      %p326 = scmp.eq.s32.totalorder %s325, 0
      %s328 = sadd.s32 %s327, 1
      %s329 = scalar_select %p326, %s327, %s328
      %p332 = pneg %p326
      %p333 = scmp.eq.s32.totalorder %s25, 1
      %p334 = por %p332, %p333
      %p335 = scmp.ne.s32.totalorder %s327, %s330
      %p336 = scmp.eq.s32.totalorder %s25, 0
      %p337 = por %p335, %p336
      %p338 = scmp.ne.s32.totalorder %s327, %s330
      %p339 = scmp.eq.s32.totalorder %s30, 1
      %p340 = por %p338, %p339
      %p341 = scmp.ne.s32.totalorder %s330, %s331
      %p342 = scmp.eq.s32.totalorder %s30, 0
      %p343 = por %p341, %p342
      %p344 = scmp.ne.s32.totalorder %s330, %s331
      %p345 = scmp.eq.s32.totalorder %s31, 1
      %p346 = por %p344, %p345
      %p348 = scmp.ne.s32.totalorder %s331, %s347
      %p349 = scmp.eq.s32.totalorder %s31, 0
      %p350 = por %p348, %p349
      %s351 = ssub.s32 %s25, %s32
      %p352 = scmp.eq.s32.totalorder %s351, 0
      %s354 = sadd.s32 %s353, 1
      %s355 = scalar_select %p352, %s353, %s354
      %p358 = pneg %p352
      %p359 = scmp.eq.s32.totalorder %s25, 1
      %p360 = por %p358, %p359
      %p361 = scmp.ne.s32.totalorder %s353, %s356
      %p362 = scmp.eq.s32.totalorder %s25, 0
      %p363 = por %p361, %p362
      %p364 = scmp.ne.s32.totalorder %s353, %s356
      %p365 = scmp.eq.s32.totalorder %s30, 1
      %p366 = por %p364, %p365
      %p367 = scmp.ne.s32.totalorder %s356, %s357
      %p368 = scmp.eq.s32.totalorder %s30, 0
      %p369 = por %p367, %p368
      %p370 = scmp.ne.s32.totalorder %s356, %s357
      %p371 = scmp.eq.s32.totalorder %s31, 1
      %p372 = por %p370, %p371
      %p374 = scmp.ne.s32.totalorder %s357, %s373
      %p375 = scmp.eq.s32.totalorder %s31, 0
      %p376 = por %p374, %p375
      %s377 = ssub.s32 %s25, %s32
      %p378 = scmp.eq.s32.totalorder %s377, 0
      %s380 = sadd.s32 %s379, 1
      %s381 = scalar_select %p378, %s379, %s380
      %p384 = pneg %p378
      %p385 = scmp.eq.s32.totalorder %s25, 1
      %p386 = por %p384, %p385
      %p387 = scmp.ne.s32.totalorder %s379, %s382
      %p388 = scmp.eq.s32.totalorder %s25, 0
      %p389 = por %p387, %p388
      %p390 = scmp.ne.s32.totalorder %s379, %s382
      %p391 = scmp.eq.s32.totalorder %s30, 1
      %p392 = por %p390, %p391
      %p393 = scmp.ne.s32.totalorder %s382, %s383
      %p394 = scmp.eq.s32.totalorder %s30, 0
      %p395 = por %p393, %p394
      %p396 = scmp.ne.s32.totalorder %s382, %s383
      %p397 = scmp.eq.s32.totalorder %s31, 1
      %p398 = por %p396, %p397
      %p400 = scmp.ne.s32.totalorder %s383, %s399
      %p401 = scmp.eq.s32.totalorder %s31, 0
      %p402 = por %p400, %p401
      %s403 = ssub.s32 %s25, %s32
      %p404 = scmp.eq.s32.totalorder %s403, 0
      %s406 = sadd.s32 %s405, 1
      %s407 = scalar_select %p404, %s405, %s406
      %p410 = pneg %p404
      %p411 = scmp.eq.s32.totalorder %s25, 1
      %p412 = por %p410, %p411
      %p413 = scmp.ne.s32.totalorder %s405, %s408
      %p414 = scmp.eq.s32.totalorder %s25, 0
      %p415 = por %p413, %p414
      %p416 = scmp.ne.s32.totalorder %s405, %s408
      %p417 = scmp.eq.s32.totalorder %s30, 1
      %p418 = por %p416, %p417
      %p419 = scmp.ne.s32.totalorder %s408, %s409
      %p420 = scmp.eq.s32.totalorder %s30, 0
      %p421 = por %p419, %p420
      %p422 = scmp.ne.s32.totalorder %s408, %s409
      %p423 = scmp.eq.s32.totalorder %s31, 1
      %p424 = por %p422, %p423
      %p426 = scmp.ne.s32.totalorder %s409, %s425
      %p427 = scmp.eq.s32.totalorder %s31, 0
      %p428 = por %p426, %p427
      %s430 = sadd.s32 %s429, 1
      %p433 = scmp.eq.s32.totalorder %s25, 1
      %p434 = scmp.ne.s32.totalorder %s429, %s431
      %p435 = scmp.eq.s32.totalorder %s25, 0
      %p436 = por %p434, %p435
      %p437 = scmp.ne.s32.totalorder %s429, %s431
      %p438 = scmp.eq.s32.totalorder %s30, 1
      %p439 = por %p437, %p438
      %p440 = scmp.ne.s32.totalorder %s431, %s432
      %p441 = scmp.eq.s32.totalorder %s30, 0
      %p442 = por %p440, %p441
      %p443 = scmp.ne.s32.totalorder %s431, %s432
      %p444 = scmp.eq.s32.totalorder %s31, 1
      %p445 = por %p443, %p444
      %p447 = scmp.ne.s32.totalorder %s432, %s446
      %p448 = scmp.eq.s32.totalorder %s31, 0
      %p449 = por %p447, %p448
      %s451 = sadd.s32 %s450, 1
      %p454 = scmp.eq.s32.totalorder %s25, 1
      %p455 = scmp.ne.s32.totalorder %s450, %s452
      %p456 = scmp.eq.s32.totalorder %s25, 0
      %p457 = por %p455, %p456
      %p458 = scmp.ne.s32.totalorder %s450, %s452
      %p459 = scmp.eq.s32.totalorder %s30, 1
      %p460 = por %p458, %p459
      %p461 = scmp.ne.s32.totalorder %s452, %s453
      %p462 = scmp.eq.s32.totalorder %s30, 0
      %p463 = por %p461, %p462
      %p464 = scmp.ne.s32.totalorder %s452, %s453
      %p465 = scmp.eq.s32.totalorder %s31, 1
      %p466 = por %p464, %p465
      %p468 = scmp.ne.s32.totalorder %s453, %s467
      %p469 = scmp.eq.s32.totalorder %s31, 0
      %p470 = por %p468, %p469
      %s472 = sadd.s32 %s471, 1
      %p475 = scmp.eq.s32.totalorder %s25, 1
      %p476 = scmp.ne.s32.totalorder %s471, %s473
      %p477 = scmp.eq.s32.totalorder %s25, 0
      %p478 = por %p476, %p477
      %p479 = scmp.ne.s32.totalorder %s471, %s473
      %p480 = scmp.eq.s32.totalorder %s30, 1
      %p481 = por %p479, %p480
      %p482 = scmp.ne.s32.totalorder %s473, %s474
      %p483 = scmp.eq.s32.totalorder %s30, 0
      %p484 = por %p482, %p483
      %p485 = scmp.ne.s32.totalorder %s473, %s474
      %p486 = scmp.eq.s32.totalorder %s31, 1
      %p487 = por %p485, %p486
      %p489 = scmp.ne.s32.totalorder %s474, %s488
      %p490 = scmp.eq.s32.totalorder %s31, 0
      %p491 = por %p489, %p490
      %p492 = scmp.le.s32.totalorder 1, %s25
      %p493 = scmp.lt.s32.totalorder %s25, 3
      %p494 = pnand %p492, %p493
      %p495 = pneg %p494
      // Predicated region
      $region9: #{tinyvit_forward.1} parent=5 // pred_check
        _
      $region10: #{tinyvit_forward.1} parent=5 // pred_check_branch
        %497 = sbr.rel (%p494) target = $region12
      $region11: #{tinyvit_forward.1} parent=5 // pred_region
        %s498 = ssub.s32 %s25, 1
        // Predicated region
        $region13: #{tinyvit_forward.1} parent=11 // pred_check
          %p499 = pneg %p46
        $region14: #{tinyvit_forward.1} parent=11 // pred_check_branch
          %501 = sbr.rel (%p499) target = $region16
        $region15: #{tinyvit_forward.1} parent=11 // pred_region
          _
        $region16: #{tinyvit_forward.1} parent=11 // pred_fallthru
          _
        // Predicated region
        $region17: #{tinyvit_forward.1} parent=11 // pred_check
          %p502 = pneg %p67
        $region18: #{tinyvit_forward.1} parent=11 // pred_check_branch
          %504 = sbr.rel (%p502) target = $region20
        $region19: #{tinyvit_forward.1} parent=11 // pred_region
          _
        $region20: #{tinyvit_forward.1} parent=11 // pred_fallthru
          _
        // Predicated region
        $region21: #{tinyvit_forward.1} parent=11 // pred_check
          %p505 = pneg %p88
        $region22: #{tinyvit_forward.1} parent=11 // pred_check_branch
          %507 = sbr.rel (%p505) target = $region24
        $region23: #{tinyvit_forward.1} parent=11 // pred_region
          _
        $region24: #{tinyvit_forward.1} parent=11 // pred_fallthru
          _
        // Predicated region
        $region25: #{tinyvit_forward.1} parent=11 // pred_check
          %p508 = pneg %p109
        $region26: #{tinyvit_forward.1} parent=11 // pred_check_branch
          %510 = sbr.rel (%p508) target = $region28
        $region27: #{tinyvit_forward.1} parent=11 // pred_region
          _
        $region28: #{tinyvit_forward.1} parent=11 // pred_fallthru
          _
        // Predicated region
        $region29: #{tinyvit_forward.1} parent=11 // pred_check
          %p511 = pneg %p442
        $region30: #{tinyvit_forward.1} parent=11 // pred_check_branch
          %513 = sbr.rel (%p511) target = $region32
        $region31: #{tinyvit_forward.1} parent=11 // pred_region
          _
        $region32: #{tinyvit_forward.1} parent=11 // pred_fallthru
          _
        // Predicated region
        $region33: #{tinyvit_forward.1} parent=11 // pred_check
          %p514 = pneg %p463
        $region34: #{tinyvit_forward.1} parent=11 // pred_check_branch
          %516 = sbr.rel (%p514) target = $region36
        $region35: #{tinyvit_forward.1} parent=11 // pred_region
          _
        $region36: #{tinyvit_forward.1} parent=11 // pred_fallthru
          _
      $region12: #{tinyvit_forward.1} parent=5 // pred_fallthru
        _
      %p517 = scmp.lt.s32.totalorder %s25, 2
      // Predicated region
      $region37: #{tinyvit_forward.1} parent=5 // pred_check
        %p518 = pneg %p517
      $region38: #{tinyvit_forward.1} parent=5 // pred_check_branch
        %520 = sbr.rel (%p518) target = $region40
      $region39: #{tinyvit_forward.1} parent=5 // pred_region
        // Predicated region
        $region41: #{tinyvit_forward.1} parent=39 // pred_check
          %p521 = pneg %p129
        $region42: #{tinyvit_forward.1} parent=39 // pred_check_branch
          %523 = sbr.rel (%p521) target = $region44
        $region43: #{tinyvit_forward.1} parent=39 // pred_region
          %p524 = scmp.lt.s32.totalorder %s25, 1
          %s525 = scalar_select %p524, %s25, 1
          %s526 = scalar_lea.vmem %s4, %s525
        $region44: #{tinyvit_forward.1} parent=39 // pred_fallthru
          _
        // Predicated region
        $region45: #{tinyvit_forward.1} parent=39 // pred_check
          %p527 = pneg %p155
        $region46: #{tinyvit_forward.1} parent=39 // pred_check_branch
          %529 = sbr.rel (%p527) target = $region48
        $region47: #{tinyvit_forward.1} parent=39 // pred_region
          %p530 = scmp.lt.s32.totalorder %s25, 1
          %s531 = scalar_select %p530, %s25, 1
          %s532 = scalar_lea.vmem %s5, %s531
        $region48: #{tinyvit_forward.1} parent=39 // pred_fallthru
          _
        // Predicated region
        $region49: #{tinyvit_forward.1} parent=39 // pred_check
          %p533 = pneg %p181
        $region50: #{tinyvit_forward.1} parent=39 // pred_check_branch
          %535 = sbr.rel (%p533) target = $region52
        $region51: #{tinyvit_forward.1} parent=39 // pred_region
          %p536 = scmp.lt.s32.totalorder %s25, 1
          %s537 = scalar_select %p536, %s25, 1
          %s538 = smul.addr %s537, 4
          %s539 = smul.addr %s538, 8
          %s540 = scalar_lea.vmem %s6, %s539
        $region52: #{tinyvit_forward.1} parent=39 // pred_fallthru
          _
        // Predicated region
        $region53: #{tinyvit_forward.1} parent=39 // pred_check
          %p541 = pneg %p207
        $region54: #{tinyvit_forward.1} parent=39 // pred_check_branch
          %543 = sbr.rel (%p541) target = $region56
        $region55: #{tinyvit_forward.1} parent=39 // pred_region
          %p544 = scmp.lt.s32.totalorder %s25, 1
          %s545 = scalar_select %p544, %s25, 1
          %s546 = scalar_lea.vmem %s7, %s545
        $region56: #{tinyvit_forward.1} parent=39 // pred_fallthru
          _
        // Predicated region
        $region57: #{tinyvit_forward.1} parent=39 // pred_check
          %p547 = pneg %p233
        $region58: #{tinyvit_forward.1} parent=39 // pred_check_branch
          %549 = sbr.rel (%p547) target = $region60
        $region59: #{tinyvit_forward.1} parent=39 // pred_region
          %p550 = scmp.lt.s32.totalorder %s25, 1
          %s551 = scalar_select %p550, %s25, 1
          %s552 = smul.addr %s551, 4
          %s553 = smul.addr %s552, 8
          %s554 = scalar_lea.vmem %s8, %s553
        $region60: #{tinyvit_forward.1} parent=39 // pred_fallthru
          _
        // Predicated region
        $region61: #{tinyvit_forward.1} parent=39 // pred_check
          %p555 = pneg %p259
        $region62: #{tinyvit_forward.1} parent=39 // pred_check_branch
          %557 = sbr.rel (%p555) target = $region64
        $region63: #{tinyvit_forward.1} parent=39 // pred_region
          %p558 = scmp.lt.s32.totalorder %s25, 1
          %s559 = scalar_select %p558, %s25, 1
          %s560 = scalar_lea.vmem %s9, %s559
        $region64: #{tinyvit_forward.1} parent=39 // pred_fallthru
          _
        // Predicated region
        $region65: #{tinyvit_forward.1} parent=39 // pred_check
          %p561 = pneg %p285
        $region66: #{tinyvit_forward.1} parent=39 // pred_check_branch
          %563 = sbr.rel (%p561) target = $region68
        $region67: #{tinyvit_forward.1} parent=39 // pred_region
          %p564 = scmp.lt.s32.totalorder %s25, 1
          %s565 = scalar_select %p564, %s25, 1
          %s566 = scalar_lea.vmem %s10, %s565
        $region68: #{tinyvit_forward.1} parent=39 // pred_fallthru
          _
        // Predicated region
        $region69: #{tinyvit_forward.1} parent=39 // pred_check
          %p567 = pneg %p311
        $region70: #{tinyvit_forward.1} parent=39 // pred_check_branch
          %569 = sbr.rel (%p567) target = $region72
        $region71: #{tinyvit_forward.1} parent=39 // pred_region
          %p570 = scmp.lt.s32.totalorder %s25, 1
          %s571 = scalar_select %p570, %s25, 1
          %s572 = scalar_lea.vmem %s11, %s571
        $region72: #{tinyvit_forward.1} parent=39 // pred_fallthru
          _
        // Predicated region
        $region73: #{tinyvit_forward.1} parent=39 // pred_check
          %p573 = pneg %p337
        $region74: #{tinyvit_forward.1} parent=39 // pred_check_branch
          %575 = sbr.rel (%p573) target = $region76
        $region75: #{tinyvit_forward.1} parent=39 // pred_region
          %p576 = scmp.lt.s32.totalorder %s25, 1
          %s577 = scalar_select %p576, %s25, 1
          %s578 = smul.addr %s577, 4
          %s579 = smul.addr %s578, 8
          %s580 = scalar_lea.vmem %s12, %s579
        $region76: #{tinyvit_forward.1} parent=39 // pred_fallthru
          _
        // Predicated region
        $region77: #{tinyvit_forward.1} parent=39 // pred_check
          %p581 = pneg %p363
        $region78: #{tinyvit_forward.1} parent=39 // pred_check_branch
          %583 = sbr.rel (%p581) target = $region80
        $region79: #{tinyvit_forward.1} parent=39 // pred_region
          %p584 = scmp.lt.s32.totalorder %s25, 1
          %s585 = scalar_select %p584, %s25, 1
          %s586 = scalar_lea.vmem %s13, %s585
        $region80: #{tinyvit_forward.1} parent=39 // pred_fallthru
          _
        // Predicated region
        $region81: #{tinyvit_forward.1} parent=39 // pred_check
          %p587 = pneg %p389
        $region82: #{tinyvit_forward.1} parent=39 // pred_check_branch
          %589 = sbr.rel (%p587) target = $region84
        $region83: #{tinyvit_forward.1} parent=39 // pred_region
          %p590 = scmp.lt.s32.totalorder %s25, 1
          %s591 = scalar_select %p590, %s25, 1
          %s592 = smul.addr %s591, 8
          %s593 = smul.addr %s592, 8
          %s594 = scalar_lea.vmem %s14, %s593
        $region84: #{tinyvit_forward.1} parent=39 // pred_fallthru
          _
        // Predicated region
        $region85: #{tinyvit_forward.1} parent=39 // pred_check
          %p595 = pneg %p415
        $region86: #{tinyvit_forward.1} parent=39 // pred_check_branch
          %597 = sbr.rel (%p595) target = $region88
        $region87: #{tinyvit_forward.1} parent=39 // pred_region
          %p598 = scmp.lt.s32.totalorder %s25, 1
          %s599 = scalar_select %p598, %s25, 1
          %s600 = scalar_lea.vmem %s15, %s599
        $region88: #{tinyvit_forward.1} parent=39 // pred_fallthru
          _
      $region40: #{tinyvit_forward.1} parent=5 // pred_fallthru
        _
      %p601 = scmp.le.s32.totalorder 1, %s25
      %p602 = scmp.lt.s32.totalorder %s25, 3
      %p603 = pnand %p601, %p602
      %p604 = pneg %p603
      // Predicated region
      $region89: #{tinyvit_forward.1} parent=5 // pred_check
        _
      $region90: #{tinyvit_forward.1} parent=5 // pred_check_branch
        %606 = sbr.rel (%p603) target = $region92
      $region91: #{tinyvit_forward.1} parent=5 // pred_region
        %s607 = ssub.s32 %s25, 1
        %p608 = pneg %p46
        %p609 = pneg %p43
        %p610 = pneg %p67
        %p611 = pneg %p64
        %p612 = pneg %p88
        %p613 = pneg %p85
        %p614 = pneg %p109
        %p615 = pneg %p106
        %p616 = scmp.lt.s32.totalorder %s30, 1
        %s617 = scalar_select %p616, %s30, 1
        %s618 = scalar_lea.vmem %s4, %s617
        %p619 = pneg %p135
        %p620 = pneg %p132
        %p621 = scmp.lt.s32.totalorder %s30, 1
        %s622 = scalar_select %p621, %s30, 1
        %s623 = scalar_lea.vmem %s5, %s622
        %p624 = pneg %p161
        %p625 = pneg %p158
        %p626 = scmp.lt.s32.totalorder %s30, 1
        %s627 = scalar_select %p626, %s30, 1
        %s628 = smul.addr %s627, 4
        %s629 = smul.addr %s628, 8
        %s630 = scalar_lea.vmem %s6, %s629
        %p631 = pneg %p187
        %p632 = pneg %p184
        %p633 = scmp.lt.s32.totalorder %s30, 1
        %s634 = scalar_select %p633, %s30, 1
        %s635 = scalar_lea.vmem %s7, %s634
        %p636 = pneg %p213
        %p637 = pneg %p210
        %p638 = scmp.lt.s32.totalorder %s30, 1
        %s639 = scalar_select %p638, %s30, 1
        %s640 = smul.addr %s639, 4
        %s641 = smul.addr %s640, 8
        %s642 = scalar_lea.vmem %s8, %s641
        %p643 = pneg %p239
        %p644 = pneg %p236
        %p645 = scmp.lt.s32.totalorder %s30, 1
        %s646 = scalar_select %p645, %s30, 1
        %s647 = scalar_lea.vmem %s9, %s646
        %p648 = pneg %p265
        %p649 = pneg %p262
        %p650 = scmp.lt.s32.totalorder %s30, 1
        %s651 = scalar_select %p650, %s30, 1
        %s652 = scalar_lea.vmem %s10, %s651
        %p653 = pneg %p291
        %p654 = pneg %p288
        %p655 = scmp.lt.s32.totalorder %s30, 1
        %s656 = scalar_select %p655, %s30, 1
        %s657 = scalar_lea.vmem %s11, %s656
        %p658 = pneg %p317
        %p659 = pneg %p314
        %p660 = scmp.lt.s32.totalorder %s30, 1
        %s661 = scalar_select %p660, %s30, 1
        %s662 = smul.addr %s661, 4
        %s663 = smul.addr %s662, 8
        %s664 = scalar_lea.vmem %s12, %s663
        %p665 = pneg %p343
        %p666 = pneg %p340
        %p667 = scmp.lt.s32.totalorder %s30, 1
        %s668 = scalar_select %p667, %s30, 1
        %s669 = scalar_lea.vmem %s13, %s668
        %p670 = pneg %p369
        %p671 = pneg %p366
        %p672 = scmp.lt.s32.totalorder %s30, 1
        %s673 = scalar_select %p672, %s30, 1
        %s674 = smul.addr %s673, 8
        %s675 = smul.addr %s674, 8
        %s676 = scalar_lea.vmem %s14, %s675
        %p677 = pneg %p395
        %p678 = pneg %p392
        %p679 = scmp.lt.s32.totalorder %s30, 1
        %s680 = scalar_select %p679, %s30, 1
        %s681 = scalar_lea.vmem %s15, %s680
        %p682 = pneg %p421
        %p683 = pneg %p418
        %p684 = pneg %p442
        %p685 = pneg %p439
        %p686 = pneg %p463
        %p687 = pneg %p460
        %p688 = pneg %p484
        %p689 = pneg %p481
        %p690 = scmp.lt.s32.totalorder %s30, 1
        %s691 = scalar_select %p690, %s30, 1
        %s692 = scalar_lea.vmem %s4, %s691
        %p693 = scmp.lt.s32.totalorder %s30, 1
        %s694 = scalar_select %p693, %s30, 1
        %s695 = scalar_lea.vmem %s5, %s694
        %p696 = scmp.lt.s32.totalorder %s30, 1
        %s697 = scalar_select %p696, %s30, 1
        %s698 = smul.addr %s697, 4
        %s699 = smul.addr %s698, 8
        %s700 = scalar_lea.vmem %s6, %s699
        %p701 = scmp.lt.s32.totalorder %s30, 1
        %s702 = scalar_select %p701, %s30, 1
        %s703 = scalar_lea.vmem %s7, %s702
        %p704 = scmp.lt.s32.totalorder %s30, 1
        %s705 = scalar_select %p704, %s30, 1
        %s706 = smul.addr %s705, 4
        %s707 = smul.addr %s706, 8
        %s708 = scalar_lea.vmem %s8, %s707
        %p709 = scmp.lt.s32.totalorder %s30, 1
        %s710 = scalar_select %p709, %s30, 1
        %s711 = scalar_lea.vmem %s9, %s710
        %p712 = scmp.lt.s32.totalorder %s30, 1
        %s713 = scalar_select %p712, %s30, 1
        %s714 = scalar_lea.vmem %s10, %s713
        %p715 = scmp.lt.s32.totalorder %s30, 1
        %s716 = scalar_select %p715, %s30, 1
        %s717 = scalar_lea.vmem %s11, %s716
        %p718 = scmp.lt.s32.totalorder %s30, 1
        %s719 = scalar_select %p718, %s30, 1
        %s720 = smul.addr %s719, 4
        %s721 = smul.addr %s720, 8
        %s722 = scalar_lea.vmem %s12, %s721
        %p723 = scmp.lt.s32.totalorder %s30, 1
        %s724 = scalar_select %p723, %s30, 1
        %s725 = scalar_lea.vmem %s13, %s724
        %p726 = scmp.lt.s32.totalorder %s30, 1
        %s727 = scalar_select %p726, %s30, 1
        %s728 = smul.addr %s727, 8
        %s729 = smul.addr %s728, 8
        %s730 = scalar_lea.vmem %s14, %s729
        %p731 = scmp.lt.s32.totalorder %s30, 1
        %s732 = scalar_select %p731, %s30, 1
        %s733 = scalar_lea.vmem %s15, %s732
        %p734 = scmp.eq.s32.totalorder %s30, 0
        // Predicated region
        $region93: #{tinyvit_forward.1} parent=91 // pred_check
          %p735 = pneg %p734
        $region94: #{tinyvit_forward.1} parent=91 // pred_check_branch
          %737 = sbr.rel (%p735) target = $region96
        $region95: #{tinyvit_forward.1} parent=91 // pred_region
          %v738 = vld [vmem:[%s0] sm:$0xff]
          %v739 = vld [vmem:[%s0 + $0x8] sm:$0xff]
          %v740 = vld [vmem:[%s0 + $0x10] sm:$0xff]
          %v741 = vld [vmem:[%s0 + $0x18] sm:$0xff]
          %v742 = vld [vmem:[%s2] sm:$0xff]
          %v743 = vld [vmem:[%s2 + $0x8] sm:$0xff]
          %v744 = vld [vmem:[%s2 + $0x10] sm:$0xff]
          %v745 = vld [vmem:[%s2 + $0x18] sm:$0xff]
          %v746 = vld [vmem:[%s2 + $0x20] sm:$0xff]
          %v747 = vld [vmem:[%s2 + $0x28] sm:$0xff]
          %v748 = vld [vmem:[%s2 + $0x30] sm:$0xff]
          %v749 = vld [vmem:[%s2 + $0x38] sm:$0xff]
          %v750 = vld [vmem:[%s3] sm:$0x1]
          %v752 = vlaneseq
          %v753 = vshrl.u32 %v752, 7
          %v754 = vsub.s32 0, %v753
          %v755 = vrot.slane %v750, %v754
          %vm757 = vcmask 523264
          %v759 = vsel %vm757, %v738, 0
          %v762 = vsel %vm757, %v739, 0
          %v765 = vsel %vm757, %v740, 0
          %v768 = vsel %vm757, %v741, 0
          %770 = vmatprep.subr.mxu0 0.0
          %771 = vmatpush1.msra.mxu0 0.0
          %772 = vmatprep.subr.mxu0 0.0
          %773 = vmatpush1.msra.mxu0 0.0
          %774 = vmatprep.subr.mxu0 0.0
          %775 = vmatpush1.msra.mxu0 0.0
          %776 = vmatprep.subr.mxu0 0.0
          %777 = vmatpush1.msra.mxu0 0.0
          %778 = vmatprep.subr.mxu0 0.0
          %779 = vmatpush1.msra.mxu0 0.0
          %780 = vmatprep.subr.mxu0 0.0
          %781 = vmatpush1.msra.mxu0 0.0
          %782 = vmatprep.subr.mxu0 0.0
          %783 = vmatpush1.msra.mxu0 0.0
          %784 = vmatprep.subr.mxu0 0.0
          %785 = vmatpush1.msra.mxu0 0.0
          %786 = vmatprep.subr.mxu0 0.0
          %787 = vmatpush1.msra.mxu0 %v749
          %788 = vmatprep.subr.mxu0 0.0
          %789 = vmatpush1.msra.mxu0 %v748
          %790 = vmatprep.subr.mxu0 0.0
          %791 = vmatpush1.msra.mxu0 %v747
          %792 = vmatprep.subr.mxu0 0.0
          %793 = vmatpush1.msra.mxu0 %v746
          %794 = vmatprep.subr.mxu0 0.0
          %795 = vmatpush1.msra.mxu0 %v745
          %796 = vmatprep.subr.mxu0 0.0
          %797 = vmatpush1.msra.mxu0 %v744
          %798 = vmatprep.subr.mxu0 0.0
          %799 = vmatpush1.msra.mxu0 %v743
          %800 = vmatprep.subr.mxu0 0.0
          %801 = vmatpush1.msra.mxu0 %v742
          %802 = vmatprep.subr.mxu0 0.0
          %803 = vmatpush2.msra.mxu0 0.0
          %804 = vmatprep.subr.mxu0 0.0
          %805 = vmatpush2.msra.mxu0 0.0
          %806 = vmatprep.subr.mxu0 0.0
          %807 = vmatpush2.msra.mxu0 0.0
          %808 = vmatprep.subr.mxu0 0.0
          %809 = vmatpush2.msra.mxu0 0.0
          %810 = vmatprep.subr.mxu0 0.0
          %811 = vmatpush2.msra.mxu0 0.0
          %812 = vmatprep.subr.mxu0 0.0
          %813 = vmatpush2.msra.mxu0 0.0
          %814 = vmatprep.subr.mxu0 0.0
          %815 = vmatpush2.msra.mxu0 0.0
          %816 = vmatprep.subr.mxu0 0.0
          %817 = vmatpush2.msra.mxu0 0.0
          %818 = vmatprep.subr.mxu0 0.0
          %819 = vmatpush2.msra.mxu0 0.0
          %820 = vmatprep.subr.mxu0 0.0
          %821 = vmatpush2.msra.mxu0 0.0
          %822 = vmatprep.subr.mxu0 0.0
          %823 = vmatpush2.msra.mxu0 0.0
          %824 = vmatprep.subr.mxu0 0.0
          %825 = vmatpush2.msra.mxu0 0.0
          %826 = vmatprep.subr.mxu0 0.0
          %827 = vmatpush2.msra.mxu0 0.0
          %828 = vmatprep.subr.mxu0 0.0
          %829 = vmatpush2.msra.mxu0 0.0
          %830 = vmatprep.subr.mxu0 0.0
          %831 = vmatpush2.msra.mxu0 0.0
          %832 = vmatprep.subr.mxu0 0.0
          %833 = vmatpush2.msra.mxu0 0.0
          %834 = vmatprep.mubr.f32.mxu0 0.0
          %835 = vmatmul.mubr.f32.gmra.mxu0 %v759
          %v836 = vpop.f32.mrf.mxu0
          %v837 = vadd.f32 %v755, %v836
          %v838 = vpop.f32.mrf.mxu0
          %839 = vmatprep.mubr.f32.mxu0 0.0
          %840 = vmatmul.mubr.f32.gmra.mxu0 %v762
          %v841 = vpop.f32.mrf.mxu0
          %v842 = vadd.f32 %v755, %v841
          %v843 = vpop.f32.mrf.mxu0
          %844 = vmatprep.mubr.f32.mxu0 0.0
          %845 = vmatmul.mubr.f32.gmra.mxu0 %v765
          %v846 = vpop.f32.mrf.mxu0
          %v847 = vadd.f32 %v755, %v846
          %v848 = vpop.f32.mrf.mxu0
          %849 = vmatprep.mubr.f32.mxu0 0.0
          %850 = vmatmul.mubr.f32.gmra.mxu0 %v768
          %v851 = vpop.f32.mrf.mxu0
          %v852 = vadd.f32 %v755, %v851
          %v853 = vpop.f32.mrf.mxu0
          %854 = vdwg.mxu0
          %v855 = vld [vmem:[%s1] sm:$0xff]
          %v856 = vld [vmem:[%s1 + $0x8] sm:$0xff]
          %v857 = vld [vmem:[%s1 + $0x10] sm:$0xff]
          %v858 = vld [vmem:[%s1 + $0x18] sm:$0xff]
          %860 = vset.pattern.permute.xlu0 0
          %861 = vperm.xlu0 %860, %v855
          %v862 = vpop.permute.xlu0 %861
          %865 = vset.pattern.permute.xlu0 0
          %866 = vperm.xlu0 %865, %v856
          %v867 = vpop.permute.xlu0 %866
          %870 = vset.pattern.permute.xlu0 0
          %871 = vperm.xlu0 %870, %v857
          %v872 = vpop.permute.xlu0 %871
          %875 = vset.pattern.permute.xlu0 0
          %876 = vperm.xlu0 %875, %v858
          %v877 = vpop.permute.xlu0 %876
          %v879 = vmul.f32 %v837, %v862
          %v880 = vmul.f32 %v842, %v867
          %v881 = vmul.f32 %v847, %v872
          %v882 = vmul.f32 %v852, %v877
          %vm883 = vcmask 261120
          %884 = vst.msk [vmem:[#allocation2] sm:$0xff] %vm883, %v879
          %885 = vst.msk [vmem:[#allocation2 + $0x8] sm:$0xff] %vm883, %v880
          %886 = vst.msk [vmem:[#allocation2 + $0x10] sm:$0xff] %vm883, %v881
          %887 = vst.msk [vmem:[#allocation2 + $0x18] sm:$0xff] %vm883, %v882
        $region96: #{tinyvit_forward.1} parent=91 // pred_fallthru
          _
        %v888 = vld [vmem:[#allocation2] sm:$0xff]
        %v889 = vld [vmem:[#allocation2 + $0x8] sm:$0xff]
        %v890 = vld [vmem:[#allocation2 + $0x10] sm:$0xff]
        %v891 = vld [vmem:[#allocation2 + $0x18] sm:$0xff]
        %v892 = vld [vmem:[%s692] sm:$0x1]
        %v893 = vld [vmem:[%s695] sm:$0x1]
        %vm894 = vcmask 261120
        %v895 = vsel %vm894, %v888, 0.0
        %896 = vadd.xlane.f32.xlu0 %v895
        %v897 = vpop.xlane.xlu0 %896
        %v898 = vsel %vm894, %v889, 0.0
        %899 = vadd.xlane.f32.xlu0 %v898
        %v900 = vpop.xlane.xlu0 %899
        %v901 = vsel %vm894, %v890, 0.0
        %902 = vadd.xlane.f32.xlu0 %v901
        %v903 = vpop.xlane.xlu0 %902
        %v904 = vsel %vm894, %v891, 0.0
        %905 = vadd.xlane.f32.xlu0 %v904
        %v906 = vpop.xlane.xlu0 %905
        %v907 = vrcp.pop 32.0
        %v908 = vmul.f32 %v897, %v907
        %v909 = vmul.f32 %v900, %v907
        %v910 = vmul.f32 %v903, %v907
        %v911 = vmul.f32 %v906, %v907
        %v912 = vsub.f32 %v888, %v908
        %v913 = vsub.f32 %v889, %v909
        %v914 = vsub.f32 %v890, %v910
        %v915 = vsub.f32 %v891, %v911
        %v916 = vmul.f32 %v912, %v912
        %v917 = vmul.f32 %v913, %v913
        %v918 = vmul.f32 %v914, %v914
        %v919 = vmul.f32 %v915, %v915
        %v920 = vsel %vm894, %v916, 0.0
        %921 = vadd.xlane.f32.xlu0 %v920
        %v922 = vpop.xlane.xlu0 %921
        %v923 = vsel %vm894, %v917, 0.0
        %924 = vadd.xlane.f32.xlu0 %v923
        %v925 = vpop.xlane.xlu0 %924
        %v926 = vsel %vm894, %v918, 0.0
        %927 = vadd.xlane.f32.xlu0 %v926
        %v928 = vpop.xlane.xlu0 %927
        %v929 = vsel %vm894, %v919, 0.0
        %930 = vadd.xlane.f32.xlu0 %v929
        %v931 = vpop.xlane.xlu0 %930
        %v932 = vmul.f32 %v922, %v907
        %v933 = vmul.f32 %v925, %v907
        %v934 = vmul.f32 %v928, %v907
        %v935 = vmul.f32 %v931, %v907
        %v936 = vadd.f32 %v932, 1e-05
        %v937 = vadd.f32 %v933, 1e-05
        %v938 = vadd.f32 %v934, 1e-05
        %v939 = vadd.f32 %v935, 1e-05
        %v940 = vrsqrt.pop %v936
        %v941 = vrsqrt.pop %v937
        %v942 = vrsqrt.pop %v938
        %v943 = vrsqrt.pop %v939
        %v944 = vmul.f32 %v912, %v940
        %v945 = vmul.f32 %v913, %v941
        %v946 = vmul.f32 %v914, %v942
        %v947 = vmul.f32 %v915, %v943
        %v949 = vlaneseq
        %v950 = vshrl.u32 %v949, 7
        %v951 = vsub.s32 0, %v950
        %v952 = vrot.slane %v892, %v951
        %v954 = vmul.f32 %v944, %v952
        %v955 = vmul.f32 %v945, %v952
        %v956 = vmul.f32 %v946, %v952
        %v957 = vmul.f32 %v947, %v952
        %v959 = vlaneseq
        %v960 = vshrl.u32 %v959, 7
        %v961 = vsub.s32 0, %v960
        %v962 = vrot.slane %v893, %v961
        %v964 = vadd.f32 %v954, %v962
        %v965 = vadd.f32 %v955, %v962
        %v966 = vadd.f32 %v956, %v962
        %v967 = vadd.f32 %v957, %v962
        %v968 = vld [vmem:[%s700] sm:$0xff]
        %v969 = vld [vmem:[%s700 + $0x8] sm:$0xff]
        %v970 = vld [vmem:[%s700 + $0x10] sm:$0xff]
        %v971 = vld [vmem:[%s700 + $0x18] sm:$0xff]
        %v972 = vld [vmem:[%s703] sm:$0x1]
        %v974 = vlaneseq
        %v975 = vshrl.u32 %v974, 7
        %v976 = vsub.s32 0, %v975
        %v977 = vrot.slane %v972, %v976
        %v980 = vsel %vm894, %v964, 0
        %v983 = vsel %vm894, %v965, 0
        %v986 = vsel %vm894, %v966, 0
        %v989 = vsel %vm894, %v967, 0
        %991 = vmatprep.subr.mxu0 0.0
        %992 = vmatpush1.msra.mxu0 0.0
        %993 = vmatprep.subr.mxu0 0.0
        %994 = vmatpush1.msra.mxu0 0.0
        %995 = vmatprep.subr.mxu0 0.0
        %996 = vmatpush1.msra.mxu0 0.0
        %997 = vmatprep.subr.mxu0 0.0
        %998 = vmatpush1.msra.mxu0 0.0
        %999 = vmatprep.subr.mxu0 0.0
        %1000 = vmatpush1.msra.mxu0 0.0
        %1001 = vmatprep.subr.mxu0 0.0
        %1002 = vmatpush1.msra.mxu0 0.0
        %1003 = vmatprep.subr.mxu0 0.0
        %1004 = vmatpush1.msra.mxu0 0.0
        %1005 = vmatprep.subr.mxu0 0.0
        %1006 = vmatpush1.msra.mxu0 0.0
        %1007 = vmatprep.subr.mxu0 0.0
        %1008 = vmatpush1.msra.mxu0 0.0
        %1009 = vmatprep.subr.mxu0 0.0
        %1010 = vmatpush1.msra.mxu0 0.0
        %1011 = vmatprep.subr.mxu0 0.0
        %1012 = vmatpush1.msra.mxu0 0.0
        %1013 = vmatprep.subr.mxu0 0.0
        %1014 = vmatpush1.msra.mxu0 0.0
        %1015 = vmatprep.subr.mxu0 0.0
        %1016 = vmatpush1.msra.mxu0 %v971
        %1017 = vmatprep.subr.mxu0 0.0
        %1018 = vmatpush1.msra.mxu0 %v970
        %1019 = vmatprep.subr.mxu0 0.0
        %1020 = vmatpush1.msra.mxu0 %v969
        %1021 = vmatprep.subr.mxu0 0.0
        %1022 = vmatpush1.msra.mxu0 %v968
        %1023 = vmatprep.subr.mxu0 0.0
        %1024 = vmatpush2.msra.mxu0 0.0
        %1025 = vmatprep.subr.mxu0 0.0
        %1026 = vmatpush2.msra.mxu0 0.0
        %1027 = vmatprep.subr.mxu0 0.0
        %1028 = vmatpush2.msra.mxu0 0.0
        %1029 = vmatprep.subr.mxu0 0.0
        %1030 = vmatpush2.msra.mxu0 0.0
        %1031 = vmatprep.subr.mxu0 0.0
        %1032 = vmatpush2.msra.mxu0 0.0
        %1033 = vmatprep.subr.mxu0 0.0
        %1034 = vmatpush2.msra.mxu0 0.0
        %1035 = vmatprep.subr.mxu0 0.0
        %1036 = vmatpush2.msra.mxu0 0.0
        %1037 = vmatprep.subr.mxu0 0.0
        %1038 = vmatpush2.msra.mxu0 0.0
        %1039 = vmatprep.subr.mxu0 0.0
        %1040 = vmatpush2.msra.mxu0 0.0
        %1041 = vmatprep.subr.mxu0 0.0
        %1042 = vmatpush2.msra.mxu0 0.0
        %1043 = vmatprep.subr.mxu0 0.0
        %1044 = vmatpush2.msra.mxu0 0.0
        %1045 = vmatprep.subr.mxu0 0.0
        %1046 = vmatpush2.msra.mxu0 0.0
        %1047 = vmatprep.subr.mxu0 0.0
        %1048 = vmatpush2.msra.mxu0 0.0
        %1049 = vmatprep.subr.mxu0 0.0
        %1050 = vmatpush2.msra.mxu0 0.0
        %1051 = vmatprep.subr.mxu0 0.0
        %1052 = vmatpush2.msra.mxu0 0.0
        %1053 = vmatprep.subr.mxu0 0.0
        %1054 = vmatpush2.msra.mxu0 0.0
        %1055 = vmatprep.mubr.f32.mxu0 0.0
        %1056 = vmatmul.mubr.f32.gmra.mxu0 %v980
        %v1057 = vpop.f32.mrf.mxu0
        %v1058 = vadd.f32 %v977, %v1057
        %v1059 = vpop.f32.mrf.mxu0
        %1060 = vmatprep.mubr.f32.mxu0 0.0
        %1061 = vmatmul.mubr.f32.gmra.mxu0 %v983
        %v1062 = vpop.f32.mrf.mxu0
        %v1063 = vadd.f32 %v977, %v1062
        %v1064 = vpop.f32.mrf.mxu0
        %1065 = vmatprep.mubr.f32.mxu0 0.0
        %1066 = vmatmul.mubr.f32.gmra.mxu0 %v986
        %v1067 = vpop.f32.mrf.mxu0
        %v1068 = vadd.f32 %v977, %v1067
        %v1069 = vpop.f32.mrf.mxu0
        %1070 = vmatprep.mubr.f32.mxu0 0.0
        %1071 = vmatmul.mubr.f32.gmra.mxu0 %v989
        %v1072 = vpop.f32.mrf.mxu0
        %v1073 = vadd.f32 %v977, %v1072
        %v1074 = vpop.f32.mrf.mxu0
        %1075 = vdwg.mxu0
        %v1076 = vmul.f32 %v1058, 0.35355338
        %v1077 = vmul.f32 %v1063, 0.35355338
        %v1078 = vmul.f32 %v1068, 0.35355338
        %v1079 = vmul.f32 %v1073, 0.35355338
        %1084 = vrot.lane.b32.xlu0 %v1058, 96
        %v1085 = vpop.permute.xlu0 %1084
        %1086 = vrot.lane.b32.xlu0 %v1063, 96
        %v1087 = vpop.permute.xlu0 %1086
        %1088 = vrot.lane.b32.xlu0 %v1068, 96
        %v1089 = vpop.permute.xlu0 %1088
        %1090 = vrot.lane.b32.xlu0 %v1073, 96
        %v1091 = vpop.permute.xlu0 %1090
        %v1096 = vmul.f32 %v1076, %v1085
        %v1097 = vmul.f32 %v1077, %v1087
        %v1098 = vmul.f32 %v1078, %v1089
        %v1099 = vmul.f32 %v1079, %v1091
        %vm1100 = vcmask 64512
        %v1101 = vsel %vm1100, %v1096, 0.0
        %1102 = vadd.xlane.f32.xlu0 %v1101
        %v1103 = vpop.xlane.xlu0 %1102
        %v1104 = vsel %vm1100, %v1097, 0.0
        %1105 = vadd.xlane.f32.xlu0 %v1104
        %v1106 = vpop.xlane.xlu0 %1105
        %v1107 = vsel %vm1100, %v1098, 0.0
        %1108 = vadd.xlane.f32.xlu0 %v1107
        %v1109 = vpop.xlane.xlu0 %1108
        %v1110 = vsel %vm1100, %v1099, 0.0
        %1111 = vadd.xlane.f32.xlu0 %v1110
        %v1112 = vpop.xlane.xlu0 %1111
        %v1113 = vmul.f32 %v1076, %v1089
        %v1114 = vmul.f32 %v1077, %v1091
        %v1115 = vmul.f32 %v1078, %v1085
        %v1116 = vmul.f32 %v1079, %v1087
        %v1117 = vsel %vm1100, %v1113, 0.0
        %1118 = vadd.xlane.f32.xlu0 %v1117
        %v1119 = vpop.xlane.xlu0 %1118
        %v1120 = vsel %vm1100, %v1114, 0.0
        %1121 = vadd.xlane.f32.xlu0 %v1120
        %v1122 = vpop.xlane.xlu0 %1121
        %v1123 = vsel %vm1100, %v1115, 0.0
        %1124 = vadd.xlane.f32.xlu0 %v1123
        %v1125 = vpop.xlane.xlu0 %1124
        %v1126 = vsel %vm1100, %v1116, 0.0
        %1127 = vadd.xlane.f32.xlu0 %v1126
        %v1128 = vpop.xlane.xlu0 %1127
        %v1129 = vmax.f32 %v1103, %v1119
        %v1130 = vmax.f32 %v1106, %v1122
        %v1131 = vmax.f32 %v1109, %v1125
        %v1132 = vmax.f32 %v1112, %v1128
        %v1133 = vsub.f32 %v1103, %v1129
        %v1134 = vsub.f32 %v1106, %v1130
        %v1135 = vsub.f32 %v1109, %v1131
        %v1136 = vsub.f32 %v1112, %v1132
        %v1137 = vmul.f32 %v1133, 1.442695
        %v1138 = vpow.pop %v1137
        %v1139 = vmul.f32 %v1134, 1.442695
        %v1140 = vpow.pop %v1139
        %v1141 = vmul.f32 %v1135, 1.442695
        %v1142 = vpow.pop %v1141
        %v1143 = vmul.f32 %v1136, 1.442695
        %v1144 = vpow.pop %v1143
        %v1145 = vsub.f32 %v1119, %v1129
        %v1146 = vsub.f32 %v1122, %v1130
        %v1147 = vsub.f32 %v1125, %v1131
        %v1148 = vsub.f32 %v1128, %v1132
        %v1149 = vmul.f32 %v1145, 1.442695
        %v1150 = vpow.pop %v1149
        %v1151 = vmul.f32 %v1146, 1.442695
        %v1152 = vpow.pop %v1151
        %v1153 = vmul.f32 %v1147, 1.442695
        %v1154 = vpow.pop %v1153
        %v1155 = vmul.f32 %v1148, 1.442695
        %v1156 = vpow.pop %v1155
        %v1157 = vadd.f32 %v1138, %v1150
        %v1158 = vadd.f32 %v1140, %v1152
        %v1159 = vadd.f32 %v1142, %v1154
        %v1160 = vadd.f32 %v1144, %v1156
        %v1161 = vrcp.pop %v1157
        %v1162 = vmul.f32 1.0, %v1161
        %v1163 = vrcp.pop %v1158
        %v1164 = vmul.f32 1.0, %v1163
        %v1165 = vrcp.pop %v1159
        %v1166 = vmul.f32 1.0, %v1165
        %v1167 = vrcp.pop %v1160
        %v1168 = vmul.f32 1.0, %v1167
        %v1169 = vmul.f32 %v1138, %v1162
        %v1170 = vmul.f32 %v1140, %v1164
        %v1171 = vmul.f32 %v1142, %v1166
        %v1172 = vmul.f32 %v1144, %v1168
        %v1173 = vmul.f32 %v1169, %v1058
        %v1174 = vmul.f32 %v1170, %v1063
        %v1175 = vmul.f32 %v1171, %v1068
        %v1176 = vmul.f32 %v1172, %v1073
        %v1177 = vmul.f32 %v1150, %v1162
        %v1178 = vmul.f32 %v1152, %v1164
        %v1179 = vmul.f32 %v1154, %v1166
        %v1180 = vmul.f32 %v1156, %v1168
        %v1181 = vmul.f32 %v1177, %v1068
        %v1182 = vmul.f32 %v1178, %v1073
        %v1183 = vmul.f32 %v1179, %v1058
        %v1184 = vmul.f32 %v1180, %v1063
        %v1185 = vadd.f32 %v1173, %v1181
        %v1186 = vadd.f32 %v1174, %v1182
        %v1187 = vadd.f32 %v1175, %v1183
        %v1188 = vadd.f32 %v1176, %v1184
        %1193 = vrot.lane.b32.xlu0 %v1096, 120
        %v1194 = vpop.permute.xlu0 %1193
        %1195 = vrot.lane.b32.xlu0 %v1097, 120
        %v1196 = vpop.permute.xlu0 %1195
        %1197 = vrot.lane.b32.xlu0 %v1098, 120
        %v1198 = vpop.permute.xlu0 %1197
        %1199 = vrot.lane.b32.xlu0 %v1099, 120
        %v1200 = vpop.permute.xlu0 %1199
        %v1205 = vsel %vm1100, %v1194, 0.0
        %1206 = vadd.xlane.f32.xlu0 %v1205
        %v1207 = vpop.xlane.xlu0 %1206
        %v1208 = vsel %vm1100, %v1196, 0.0
        %1209 = vadd.xlane.f32.xlu0 %v1208
        %v1210 = vpop.xlane.xlu0 %1209
        %v1211 = vsel %vm1100, %v1198, 0.0
        %1212 = vadd.xlane.f32.xlu0 %v1211
        %v1213 = vpop.xlane.xlu0 %1212
        %v1214 = vsel %vm1100, %v1200, 0.0
        %1215 = vadd.xlane.f32.xlu0 %v1214
        %v1216 = vpop.xlane.xlu0 %1215
        %1221 = vrot.lane.b32.xlu0 %v1113, 120
        %v1222 = vpop.permute.xlu0 %1221
        %1223 = vrot.lane.b32.xlu0 %v1114, 120
        %v1224 = vpop.permute.xlu0 %1223
        %1225 = vrot.lane.b32.xlu0 %v1115, 120
        %v1226 = vpop.permute.xlu0 %1225
        %1227 = vrot.lane.b32.xlu0 %v1116, 120
        %v1228 = vpop.permute.xlu0 %1227
        %v1233 = vsel %vm1100, %v1222, 0.0
        %1234 = vadd.xlane.f32.xlu0 %v1233
        %v1235 = vpop.xlane.xlu0 %1234
        %v1236 = vsel %vm1100, %v1224, 0.0
        %1237 = vadd.xlane.f32.xlu0 %v1236
        %v1238 = vpop.xlane.xlu0 %1237
        %v1239 = vsel %vm1100, %v1226, 0.0
        %1240 = vadd.xlane.f32.xlu0 %v1239
        %v1241 = vpop.xlane.xlu0 %1240
        %v1242 = vsel %vm1100, %v1228, 0.0
        %1243 = vadd.xlane.f32.xlu0 %v1242
        %v1244 = vpop.xlane.xlu0 %1243
        %v1245 = vmax.f32 %v1207, %v1235
        %v1246 = vmax.f32 %v1210, %v1238
        %v1247 = vmax.f32 %v1213, %v1241
        %v1248 = vmax.f32 %v1216, %v1244
        %v1249 = vsub.f32 %v1207, %v1245
        %v1250 = vsub.f32 %v1210, %v1246
        %v1251 = vsub.f32 %v1213, %v1247
        %v1252 = vsub.f32 %v1216, %v1248
        %v1253 = vmul.f32 %v1249, 1.442695
        %v1254 = vpow.pop %v1253
        %v1255 = vmul.f32 %v1250, 1.442695
        %v1256 = vpow.pop %v1255
        %v1257 = vmul.f32 %v1251, 1.442695
        %v1258 = vpow.pop %v1257
        %v1259 = vmul.f32 %v1252, 1.442695
        %v1260 = vpow.pop %v1259
        %v1261 = vsub.f32 %v1235, %v1245
        %v1262 = vsub.f32 %v1238, %v1246
        %v1263 = vsub.f32 %v1241, %v1247
        %v1264 = vsub.f32 %v1244, %v1248
        %v1265 = vmul.f32 %v1261, 1.442695
        %v1266 = vpow.pop %v1265
        %v1267 = vmul.f32 %v1262, 1.442695
        %v1268 = vpow.pop %v1267
        %v1269 = vmul.f32 %v1263, 1.442695
        %v1270 = vpow.pop %v1269
        %v1271 = vmul.f32 %v1264, 1.442695
        %v1272 = vpow.pop %v1271
        %v1273 = vadd.f32 %v1254, %v1266
        %v1274 = vadd.f32 %v1256, %v1268
        %v1275 = vadd.f32 %v1258, %v1270
        %v1276 = vadd.f32 %v1260, %v1272
        %v1277 = vrcp.pop %v1273
        %v1278 = vmul.f32 1.0, %v1277
        %v1279 = vrcp.pop %v1274
        %v1280 = vmul.f32 1.0, %v1279
        %v1281 = vrcp.pop %v1275
        %v1282 = vmul.f32 1.0, %v1281
        %v1283 = vrcp.pop %v1276
        %v1284 = vmul.f32 1.0, %v1283
        %v1285 = vmul.f32 %v1254, %v1278
        %v1286 = vmul.f32 %v1256, %v1280
        %v1287 = vmul.f32 %v1258, %v1282
        %v1288 = vmul.f32 %v1260, %v1284
        %v1289 = vmul.f32 %v1285, %v1058
        %v1290 = vmul.f32 %v1286, %v1063
        %v1291 = vmul.f32 %v1287, %v1068
        %v1292 = vmul.f32 %v1288, %v1073
        %v1293 = vmul.f32 %v1266, %v1278
        %v1294 = vmul.f32 %v1268, %v1280
        %v1295 = vmul.f32 %v1270, %v1282
        %v1296 = vmul.f32 %v1272, %v1284
        %v1297 = vmul.f32 %v1293, %v1068
        %v1298 = vmul.f32 %v1294, %v1073
        %v1299 = vmul.f32 %v1295, %v1058
        %v1300 = vmul.f32 %v1296, %v1063
        %v1301 = vadd.f32 %v1289, %v1297
        %v1302 = vadd.f32 %v1290, %v1298
        %v1303 = vadd.f32 %v1291, %v1299
        %v1304 = vadd.f32 %v1292, %v1300
        %1305 = vrot.lane.b32.xlu0 %v1096, 112
        %v1306 = vpop.permute.xlu0 %1305
        %1307 = vrot.lane.b32.xlu0 %v1097, 112
        %v1308 = vpop.permute.xlu0 %1307
        %1309 = vrot.lane.b32.xlu0 %v1098, 112
        %v1310 = vpop.permute.xlu0 %1309
        %1311 = vrot.lane.b32.xlu0 %v1099, 112
        %v1312 = vpop.permute.xlu0 %1311
        %v1317 = vsel %vm1100, %v1306, 0.0
        %1318 = vadd.xlane.f32.xlu0 %v1317
        %v1319 = vpop.xlane.xlu0 %1318
        %v1320 = vsel %vm1100, %v1308, 0.0
        %1321 = vadd.xlane.f32.xlu0 %v1320
        %v1322 = vpop.xlane.xlu0 %1321
        %v1323 = vsel %vm1100, %v1310, 0.0
        %1324 = vadd.xlane.f32.xlu0 %v1323
        %v1325 = vpop.xlane.xlu0 %1324
        %v1326 = vsel %vm1100, %v1312, 0.0
        %1327 = vadd.xlane.f32.xlu0 %v1326
        %v1328 = vpop.xlane.xlu0 %1327
        %1329 = vrot.lane.b32.xlu0 %v1113, 112
        %v1330 = vpop.permute.xlu0 %1329
        %1331 = vrot.lane.b32.xlu0 %v1114, 112
        %v1332 = vpop.permute.xlu0 %1331
        %1333 = vrot.lane.b32.xlu0 %v1115, 112
        %v1334 = vpop.permute.xlu0 %1333
        %1335 = vrot.lane.b32.xlu0 %v1116, 112
        %v1336 = vpop.permute.xlu0 %1335
        %v1341 = vsel %vm1100, %v1330, 0.0
        %1342 = vadd.xlane.f32.xlu0 %v1341
        %v1343 = vpop.xlane.xlu0 %1342
        %v1344 = vsel %vm1100, %v1332, 0.0
        %1345 = vadd.xlane.f32.xlu0 %v1344
        %v1346 = vpop.xlane.xlu0 %1345
        %v1347 = vsel %vm1100, %v1334, 0.0
        %1348 = vadd.xlane.f32.xlu0 %v1347
        %v1349 = vpop.xlane.xlu0 %1348
        %v1350 = vsel %vm1100, %v1336, 0.0
        %1351 = vadd.xlane.f32.xlu0 %v1350
        %v1352 = vpop.xlane.xlu0 %1351
        %v1353 = vmax.f32 %v1319, %v1343
        %v1354 = vmax.f32 %v1322, %v1346
        %v1355 = vmax.f32 %v1325, %v1349
        %v1356 = vmax.f32 %v1328, %v1352
        %v1357 = vsub.f32 %v1319, %v1353
        %v1358 = vsub.f32 %v1322, %v1354
        %v1359 = vsub.f32 %v1325, %v1355
        %v1360 = vsub.f32 %v1328, %v1356
        %v1361 = vmul.f32 %v1357, 1.442695
        %v1362 = vpow.pop %v1361
        %v1363 = vmul.f32 %v1358, 1.442695
        %v1364 = vpow.pop %v1363
        %v1365 = vmul.f32 %v1359, 1.442695
        %v1366 = vpow.pop %v1365
        %v1367 = vmul.f32 %v1360, 1.442695
        %v1368 = vpow.pop %v1367
        %v1369 = vsub.f32 %v1343, %v1353
        %v1370 = vsub.f32 %v1346, %v1354
        %v1371 = vsub.f32 %v1349, %v1355
        %v1372 = vsub.f32 %v1352, %v1356
        %v1373 = vmul.f32 %v1369, 1.442695
        %v1374 = vpow.pop %v1373
        %v1375 = vmul.f32 %v1370, 1.442695
        %v1376 = vpow.pop %v1375
        %v1377 = vmul.f32 %v1371, 1.442695
        %v1378 = vpow.pop %v1377
        %v1379 = vmul.f32 %v1372, 1.442695
        %v1380 = vpow.pop %v1379
        %v1381 = vadd.f32 %v1362, %v1374
        %v1382 = vadd.f32 %v1364, %v1376
        %v1383 = vadd.f32 %v1366, %v1378
        %v1384 = vadd.f32 %v1368, %v1380
        %v1385 = vrcp.pop %v1381
        %v1386 = vmul.f32 1.0, %v1385
        %v1387 = vrcp.pop %v1382
        %v1388 = vmul.f32 1.0, %v1387
        %v1389 = vrcp.pop %v1383
        %v1390 = vmul.f32 1.0, %v1389
        %v1391 = vrcp.pop %v1384
        %v1392 = vmul.f32 1.0, %v1391
        %v1393 = vmul.f32 %v1362, %v1386
        %v1394 = vmul.f32 %v1364, %v1388
        %v1395 = vmul.f32 %v1366, %v1390
        %v1396 = vmul.f32 %v1368, %v1392
        %v1397 = vmul.f32 %v1393, %v1058
        %v1398 = vmul.f32 %v1394, %v1063
        %v1399 = vmul.f32 %v1395, %v1068
        %v1400 = vmul.f32 %v1396, %v1073
        %v1401 = vmul.f32 %v1374, %v1386
        %v1402 = vmul.f32 %v1376, %v1388
        %v1403 = vmul.f32 %v1378, %v1390
        %v1404 = vmul.f32 %v1380, %v1392
        %v1405 = vmul.f32 %v1401, %v1068
        %v1406 = vmul.f32 %v1402, %v1073
        %v1407 = vmul.f32 %v1403, %v1058
        %v1408 = vmul.f32 %v1404, %v1063
        %v1409 = vadd.f32 %v1397, %v1405
        %v1410 = vadd.f32 %v1398, %v1406
        %v1411 = vadd.f32 %v1399, %v1407
        %v1412 = vadd.f32 %v1400, %v1408
        %1413 = vrot.lane.b32.xlu0 %v1096, 104
        %v1414 = vpop.permute.xlu0 %1413
        %1415 = vrot.lane.b32.xlu0 %v1097, 104
        %v1416 = vpop.permute.xlu0 %1415
        %1417 = vrot.lane.b32.xlu0 %v1098, 104
        %v1418 = vpop.permute.xlu0 %1417
        %1419 = vrot.lane.b32.xlu0 %v1099, 104
        %v1420 = vpop.permute.xlu0 %1419
        %v1425 = vsel %vm1100, %v1414, 0.0
        %1426 = vadd.xlane.f32.xlu0 %v1425
        %v1427 = vpop.xlane.xlu0 %1426
        %v1428 = vsel %vm1100, %v1416, 0.0
        %1429 = vadd.xlane.f32.xlu0 %v1428
        %v1430 = vpop.xlane.xlu0 %1429
        %v1431 = vsel %vm1100, %v1418, 0.0
        %1432 = vadd.xlane.f32.xlu0 %v1431
        %v1433 = vpop.xlane.xlu0 %1432
        %v1434 = vsel %vm1100, %v1420, 0.0
        %1435 = vadd.xlane.f32.xlu0 %v1434
        %v1436 = vpop.xlane.xlu0 %1435
        %1437 = vrot.lane.b32.xlu0 %v1113, 104
        %v1438 = vpop.permute.xlu0 %1437
        %1439 = vrot.lane.b32.xlu0 %v1114, 104
        %v1440 = vpop.permute.xlu0 %1439
        %1441 = vrot.lane.b32.xlu0 %v1115, 104
        %v1442 = vpop.permute.xlu0 %1441
        %1443 = vrot.lane.b32.xlu0 %v1116, 104
        %v1444 = vpop.permute.xlu0 %1443
        %v1449 = vsel %vm1100, %v1438, 0.0
        %1450 = vadd.xlane.f32.xlu0 %v1449
        %v1451 = vpop.xlane.xlu0 %1450
        %v1452 = vsel %vm1100, %v1440, 0.0
        %1453 = vadd.xlane.f32.xlu0 %v1452
        %v1454 = vpop.xlane.xlu0 %1453
        %v1455 = vsel %vm1100, %v1442, 0.0
        %1456 = vadd.xlane.f32.xlu0 %v1455
        %v1457 = vpop.xlane.xlu0 %1456
        %v1458 = vsel %vm1100, %v1444, 0.0
        %1459 = vadd.xlane.f32.xlu0 %v1458
        %v1460 = vpop.xlane.xlu0 %1459
        %v1461 = vmax.f32 %v1427, %v1451
        %v1462 = vmax.f32 %v1430, %v1454
        %v1463 = vmax.f32 %v1433, %v1457
        %v1464 = vmax.f32 %v1436, %v1460
        %v1465 = vsub.f32 %v1427, %v1461
        %v1466 = vsub.f32 %v1430, %v1462
        %v1467 = vsub.f32 %v1433, %v1463
        %v1468 = vsub.f32 %v1436, %v1464
        %v1469 = vmul.f32 %v1465, 1.442695
        %v1470 = vpow.pop %v1469
        %v1471 = vmul.f32 %v1466, 1.442695
        %v1472 = vpow.pop %v1471
        %v1473 = vmul.f32 %v1467, 1.442695
        %v1474 = vpow.pop %v1473
        %v1475 = vmul.f32 %v1468, 1.442695
        %v1476 = vpow.pop %v1475
        %v1477 = vsub.f32 %v1451, %v1461
        %v1478 = vsub.f32 %v1454, %v1462
        %v1479 = vsub.f32 %v1457, %v1463
        %v1480 = vsub.f32 %v1460, %v1464
        %v1481 = vmul.f32 %v1477, 1.442695
        %v1482 = vpow.pop %v1481
        %v1483 = vmul.f32 %v1478, 1.442695
        %v1484 = vpow.pop %v1483
        %v1485 = vmul.f32 %v1479, 1.442695
        %v1486 = vpow.pop %v1485
        %v1487 = vmul.f32 %v1480, 1.442695
        %v1488 = vpow.pop %v1487
        %v1489 = vadd.f32 %v1470, %v1482
        %v1490 = vadd.f32 %v1472, %v1484
        %v1491 = vadd.f32 %v1474, %v1486
        %v1492 = vadd.f32 %v1476, %v1488
        %v1493 = vrcp.pop %v1489
        %v1494 = vmul.f32 1.0, %v1493
        %v1495 = vrcp.pop %v1490
        %v1496 = vmul.f32 1.0, %v1495
        %v1497 = vrcp.pop %v1491
        %v1498 = vmul.f32 1.0, %v1497
        %v1499 = vrcp.pop %v1492
        %v1500 = vmul.f32 1.0, %v1499
        %v1501 = vmul.f32 %v1470, %v1494
        %v1502 = vmul.f32 %v1472, %v1496
        %v1503 = vmul.f32 %v1474, %v1498
        %v1504 = vmul.f32 %v1476, %v1500
        %v1505 = vmul.f32 %v1501, %v1058
        %v1506 = vmul.f32 %v1502, %v1063
        %v1507 = vmul.f32 %v1503, %v1068
        %v1508 = vmul.f32 %v1504, %v1073
        %v1509 = vmul.f32 %v1482, %v1494
        %v1510 = vmul.f32 %v1484, %v1496
        %v1511 = vmul.f32 %v1486, %v1498
        %v1512 = vmul.f32 %v1488, %v1500
        %v1513 = vmul.f32 %v1509, %v1068
        %v1514 = vmul.f32 %v1510, %v1073
        %v1515 = vmul.f32 %v1511, %v1058
        %v1516 = vmul.f32 %v1512, %v1063
        %v1517 = vadd.f32 %v1505, %v1513
        %v1518 = vadd.f32 %v1506, %v1514
        %v1519 = vadd.f32 %v1507, %v1515
        %v1520 = vadd.f32 %v1508, %v1516
        %1525 = vrot.lane.b32.xlu0 %v1185, 64
        %v1526 = vpop.permute.xlu0 %1525
        %1527 = vrot.lane.b32.xlu0 %v1186, 64
        %v1528 = vpop.permute.xlu0 %1527
        %1529 = vrot.lane.b32.xlu0 %v1187, 64
        %v1530 = vpop.permute.xlu0 %1529
        %1531 = vrot.lane.b32.xlu0 %v1188, 64
        %v1532 = vpop.permute.xlu0 %1531
        %1541 = vrot.lane.b32.xlu0 %v1301, 64
        %v1542 = vpop.permute.xlu0 %1541
        %1543 = vrot.lane.b32.xlu0 %v1302, 64
        %v1544 = vpop.permute.xlu0 %1543
        %1545 = vrot.lane.b32.xlu0 %v1303, 64
        %v1546 = vpop.permute.xlu0 %1545
        %1547 = vrot.lane.b32.xlu0 %v1304, 64
        %v1548 = vpop.permute.xlu0 %1547
        %1557 = vrot.lane.b32.xlu0 %v1409, 64
        %v1558 = vpop.permute.xlu0 %1557
        %1559 = vrot.lane.b32.xlu0 %v1410, 64
        %v1560 = vpop.permute.xlu0 %1559
        %1561 = vrot.lane.b32.xlu0 %v1411, 64
        %v1562 = vpop.permute.xlu0 %1561
        %1563 = vrot.lane.b32.xlu0 %v1412, 64
        %v1564 = vpop.permute.xlu0 %1563
        %1573 = vrot.lane.b32.xlu0 %v1517, 64
        %v1574 = vpop.permute.xlu0 %1573
        %1575 = vrot.lane.b32.xlu0 %v1518, 64
        %v1576 = vpop.permute.xlu0 %1575
        %1577 = vrot.lane.b32.xlu0 %v1519, 64
        %v1578 = vpop.permute.xlu0 %1577
        %1579 = vrot.lane.b32.xlu0 %v1520, 64
        %v1580 = vpop.permute.xlu0 %1579
        %v1585 = vsel %vm1100, %v1526, %v1542
        %v1586 = vsel %vm1100, %v1528, %v1544
        %v1587 = vsel %vm1100, %v1530, %v1546
        %v1588 = vsel %vm1100, %v1532, %v1548
        %vm1589 = vcmask 130048
        %v1590 = vsel %vm1589, %v1585, %v1558
        %v1591 = vsel %vm1589, %v1586, %v1560
        %v1592 = vsel %vm1589, %v1587, %v1562
        %v1593 = vsel %vm1589, %v1588, %v1564
        %vm1594 = vcmask 195584
        %v1595 = vsel %vm1594, %v1590, %v1574
        %v1596 = vsel %vm1594, %v1591, %v1576
        %v1597 = vsel %vm1594, %v1592, %v1578
        %v1598 = vsel %vm1594, %v1593, %v1580
        %v1599 = vld [vmem:[%s708] sm:$0xff]
        %v1600 = vld [vmem:[%s708 + $0x8] sm:$0xff]
        %v1601 = vld [vmem:[%s708 + $0x10] sm:$0xff]
        %v1602 = vld [vmem:[%s708 + $0x18] sm:$0xff]
        %v1604 = vsel %vm894, %v1595, 0
        %v1607 = vsel %vm894, %v1596, 0
        %v1610 = vsel %vm894, %v1597, 0
        %v1613 = vsel %vm894, %v1598, 0
        %1615 = vmatprep.subr.mxu0 0.0
        %1616 = vmatpush1.msra.mxu0 0.0
        %1617 = vmatprep.subr.mxu0 0.0
        %1618 = vmatpush1.msra.mxu0 0.0
        %1619 = vmatprep.subr.mxu0 0.0
        %1620 = vmatpush1.msra.mxu0 0.0
        %1621 = vmatprep.subr.mxu0 0.0
        %1622 = vmatpush1.msra.mxu0 0.0
        %1623 = vmatprep.subr.mxu0 0.0
        %1624 = vmatpush1.msra.mxu0 0.0
        %1625 = vmatprep.subr.mxu0 0.0
        %1626 = vmatpush1.msra.mxu0 0.0
        %1627 = vmatprep.subr.mxu0 0.0
        %1628 = vmatpush1.msra.mxu0 0.0
        %1629 = vmatprep.subr.mxu0 0.0
        %1630 = vmatpush1.msra.mxu0 0.0
        %1631 = vmatprep.subr.mxu0 0.0
        %1632 = vmatpush1.msra.mxu0 0.0
        %1633 = vmatprep.subr.mxu0 0.0
        %1634 = vmatpush1.msra.mxu0 0.0
        %1635 = vmatprep.subr.mxu0 0.0
        %1636 = vmatpush1.msra.mxu0 0.0
        %1637 = vmatprep.subr.mxu0 0.0
        %1638 = vmatpush1.msra.mxu0 0.0
        %1639 = vmatprep.subr.mxu0 0.0
        %1640 = vmatpush1.msra.mxu0 %v1602
        %1641 = vmatprep.subr.mxu0 0.0
        %1642 = vmatpush1.msra.mxu0 %v1601
        %1643 = vmatprep.subr.mxu0 0.0
        %1644 = vmatpush1.msra.mxu0 %v1600
        %1645 = vmatprep.subr.mxu0 0.0
        %1646 = vmatpush1.msra.mxu0 %v1599
        %1647 = vmatprep.subr.mxu0 0.0
        %1648 = vmatpush2.msra.mxu0 0.0
        %1649 = vmatprep.subr.mxu0 0.0
        %1650 = vmatpush2.msra.mxu0 0.0
        %1651 = vmatprep.subr.mxu0 0.0
        %1652 = vmatpush2.msra.mxu0 0.0
        %1653 = vmatprep.subr.mxu0 0.0
        %1654 = vmatpush2.msra.mxu0 0.0
        %1655 = vmatprep.subr.mxu0 0.0
        %1656 = vmatpush2.msra.mxu0 0.0
        %1657 = vmatprep.subr.mxu0 0.0
        %1658 = vmatpush2.msra.mxu0 0.0
        %1659 = vmatprep.subr.mxu0 0.0
        %1660 = vmatpush2.msra.mxu0 0.0
        %1661 = vmatprep.subr.mxu0 0.0
        %1662 = vmatpush2.msra.mxu0 0.0
        %1663 = vmatprep.subr.mxu0 0.0
        %1664 = vmatpush2.msra.mxu0 0.0
        %1665 = vmatprep.subr.mxu0 0.0
        %1666 = vmatpush2.msra.mxu0 0.0
        %1667 = vmatprep.subr.mxu0 0.0
        %1668 = vmatpush2.msra.mxu0 0.0
        %1669 = vmatprep.subr.mxu0 0.0
        %1670 = vmatpush2.msra.mxu0 0.0
        %1671 = vmatprep.subr.mxu0 0.0
        %1672 = vmatpush2.msra.mxu0 0.0
        %1673 = vmatprep.subr.mxu0 0.0
        %1674 = vmatpush2.msra.mxu0 0.0
        %1675 = vmatprep.subr.mxu0 0.0
        %1676 = vmatpush2.msra.mxu0 0.0
        %1677 = vmatprep.subr.mxu0 0.0
        %1678 = vmatpush2.msra.mxu0 0.0
        %1679 = vmatprep.mubr.f32.mxu0 0.0
        %1680 = vmatmul.mubr.f32.gmra.mxu0 %v1604
        %v1681 = vpop.f32.mrf.mxu0
        %v1682 = vadd.f32 0.0, %v1681
        %v1683 = vpop.f32.mrf.mxu0
        %1684 = vmatprep.mubr.f32.mxu0 0.0
        %1685 = vmatmul.mubr.f32.gmra.mxu0 %v1607
        %v1686 = vpop.f32.mrf.mxu0
        %v1687 = vadd.f32 0.0, %v1686
        %v1688 = vpop.f32.mrf.mxu0
        %1689 = vmatprep.mubr.f32.mxu0 0.0
        %1690 = vmatmul.mubr.f32.gmra.mxu0 %v1610
        %v1691 = vpop.f32.mrf.mxu0
        %v1692 = vadd.f32 0.0, %v1691
        %v1693 = vpop.f32.mrf.mxu0
        %1694 = vmatprep.mubr.f32.mxu0 0.0
        %1695 = vmatmul.mubr.f32.gmra.mxu0 %v1613
        %v1696 = vpop.f32.mrf.mxu0
        %v1697 = vadd.f32 0.0, %v1696
        %v1698 = vpop.f32.mrf.mxu0
        %1699 = vdwg.mxu0
        %v1700 = vadd.f32 %v888, %v1682
        %v1701 = vadd.f32 %v889, %v1687
        %v1702 = vadd.f32 %v890, %v1692
        %v1703 = vadd.f32 %v891, %v1697
        %v1704 = vld [vmem:[%s711] sm:$0x1]
        %v1706 = vlaneseq
        %v1707 = vshrl.u32 %v1706, 7
        %v1708 = vsub.s32 0, %v1707
        %v1709 = vrot.slane %v1704, %v1708
        %v1711 = vadd.f32 %v1700, %v1709
        %v1712 = vadd.f32 %v1701, %v1709
        %v1713 = vadd.f32 %v1702, %v1709
        %v1714 = vadd.f32 %v1703, %v1709
        %v1715 = vld [vmem:[%s714] sm:$0x1]
        %v1716 = vld [vmem:[%s717] sm:$0x1]
        %v1717 = vsel %vm894, %v1711, 0.0
        %1718 = vadd.xlane.f32.xlu0 %v1717
        %v1719 = vpop.xlane.xlu0 %1718
        %v1720 = vsel %vm894, %v1712, 0.0
        %1721 = vadd.xlane.f32.xlu0 %v1720
        %v1722 = vpop.xlane.xlu0 %1721
        %v1723 = vsel %vm894, %v1713, 0.0
        %1724 = vadd.xlane.f32.xlu0 %v1723
        %v1725 = vpop.xlane.xlu0 %1724
        %v1726 = vsel %vm894, %v1714, 0.0
        %1727 = vadd.xlane.f32.xlu0 %v1726
        %v1728 = vpop.xlane.xlu0 %1727
        %v1729 = vmul.f32 %v1719, %v907
        %v1730 = vmul.f32 %v1722, %v907
        %v1731 = vmul.f32 %v1725, %v907
        %v1732 = vmul.f32 %v1728, %v907
        %v1733 = vsub.f32 %v1711, %v1729
        %v1734 = vsub.f32 %v1712, %v1730
        %v1735 = vsub.f32 %v1713, %v1731
        %v1736 = vsub.f32 %v1714, %v1732
        %v1737 = vmul.f32 %v1733, %v1733
        %v1738 = vmul.f32 %v1734, %v1734
        %v1739 = vmul.f32 %v1735, %v1735
        %v1740 = vmul.f32 %v1736, %v1736
        %v1741 = vsel %vm894, %v1737, 0.0
        %1742 = vadd.xlane.f32.xlu0 %v1741
        %v1743 = vpop.xlane.xlu0 %1742
        %v1744 = vsel %vm894, %v1738, 0.0
        %1745 = vadd.xlane.f32.xlu0 %v1744
        %v1746 = vpop.xlane.xlu0 %1745
        %v1747 = vsel %vm894, %v1739, 0.0
        %1748 = vadd.xlane.f32.xlu0 %v1747
        %v1749 = vpop.xlane.xlu0 %1748
        %v1750 = vsel %vm894, %v1740, 0.0
        %1751 = vadd.xlane.f32.xlu0 %v1750
        %v1752 = vpop.xlane.xlu0 %1751
        %v1753 = vmul.f32 %v1743, %v907
        %v1754 = vmul.f32 %v1746, %v907
        %v1755 = vmul.f32 %v1749, %v907
        %v1756 = vmul.f32 %v1752, %v907
        %v1757 = vadd.f32 %v1753, 1e-05
        %v1758 = vadd.f32 %v1754, 1e-05
        %v1759 = vadd.f32 %v1755, 1e-05
        %v1760 = vadd.f32 %v1756, 1e-05
        %v1761 = vrsqrt.pop %v1757
        %v1762 = vrsqrt.pop %v1758
        %v1763 = vrsqrt.pop %v1759
        %v1764 = vrsqrt.pop %v1760
        %v1765 = vmul.f32 %v1733, %v1761
        %v1766 = vmul.f32 %v1734, %v1762
        %v1767 = vmul.f32 %v1735, %v1763
        %v1768 = vmul.f32 %v1736, %v1764
        %v1770 = vlaneseq
        %v1771 = vshrl.u32 %v1770, 7
        %v1772 = vsub.s32 0, %v1771
        %v1773 = vrot.slane %v1715, %v1772
        %v1775 = vmul.f32 %v1765, %v1773
        %v1776 = vmul.f32 %v1766, %v1773
        %v1777 = vmul.f32 %v1767, %v1773
        %v1778 = vmul.f32 %v1768, %v1773
        %v1780 = vlaneseq
        %v1781 = vshrl.u32 %v1780, 7
        %v1782 = vsub.s32 0, %v1781
        %v1783 = vrot.slane %v1716, %v1782
        %v1785 = vadd.f32 %v1775, %v1783
        %v1786 = vadd.f32 %v1776, %v1783
        %v1787 = vadd.f32 %v1777, %v1783
        %v1788 = vadd.f32 %v1778, %v1783
        %v1789 = vld [vmem:[%s722] sm:$0xff]
        %v1790 = vld [vmem:[%s722 + $0x8] sm:$0xff]
        %v1791 = vld [vmem:[%s722 + $0x10] sm:$0xff]
        %v1792 = vld [vmem:[%s722 + $0x18] sm:$0xff]
        %v1793 = vld [vmem:[%s725] sm:$0x1]
        %v1795 = vlaneseq
        %v1796 = vshrl.u32 %v1795, 7
        %v1797 = vsub.s32 0, %v1796
        %v1798 = vrot.slane %v1793, %v1797
        %v1801 = vsel %vm894, %v1785, 0
        %v1804 = vsel %vm894, %v1786, 0
        %v1807 = vsel %vm894, %v1787, 0
        %v1810 = vsel %vm894, %v1788, 0
        %1812 = vmatprep.subr.mxu0 0.0
        %1813 = vmatpush1.msra.mxu0 0.0
        %1814 = vmatprep.subr.mxu0 0.0
        %1815 = vmatpush1.msra.mxu0 0.0
        %1816 = vmatprep.subr.mxu0 0.0
        %1817 = vmatpush1.msra.mxu0 0.0
        %1818 = vmatprep.subr.mxu0 0.0
        %1819 = vmatpush1.msra.mxu0 0.0
        %1820 = vmatprep.subr.mxu0 0.0
        %1821 = vmatpush1.msra.mxu0 0.0
        %1822 = vmatprep.subr.mxu0 0.0
        %1823 = vmatpush1.msra.mxu0 0.0
        %1824 = vmatprep.subr.mxu0 0.0
        %1825 = vmatpush1.msra.mxu0 0.0
        %1826 = vmatprep.subr.mxu0 0.0
        %1827 = vmatpush1.msra.mxu0 0.0
        %1828 = vmatprep.subr.mxu0 0.0
        %1829 = vmatpush1.msra.mxu0 0.0
        %1830 = vmatprep.subr.mxu0 0.0
        %1831 = vmatpush1.msra.mxu0 0.0
        %1832 = vmatprep.subr.mxu0 0.0
        %1833 = vmatpush1.msra.mxu0 0.0
        %1834 = vmatprep.subr.mxu0 0.0
        %1835 = vmatpush1.msra.mxu0 0.0
        %1836 = vmatprep.subr.mxu0 0.0
        %1837 = vmatpush1.msra.mxu0 %v1792
        %1838 = vmatprep.subr.mxu0 0.0
        %1839 = vmatpush1.msra.mxu0 %v1791
        %1840 = vmatprep.subr.mxu0 0.0
        %1841 = vmatpush1.msra.mxu0 %v1790
        %1842 = vmatprep.subr.mxu0 0.0
        %1843 = vmatpush1.msra.mxu0 %v1789
        %1844 = vmatprep.subr.mxu0 0.0
        %1845 = vmatpush2.msra.mxu0 0.0
        %1846 = vmatprep.subr.mxu0 0.0
        %1847 = vmatpush2.msra.mxu0 0.0
        %1848 = vmatprep.subr.mxu0 0.0
        %1849 = vmatpush2.msra.mxu0 0.0
        %1850 = vmatprep.subr.mxu0 0.0
        %1851 = vmatpush2.msra.mxu0 0.0
        %1852 = vmatprep.subr.mxu0 0.0
        %1853 = vmatpush2.msra.mxu0 0.0
        %1854 = vmatprep.subr.mxu0 0.0
        %1855 = vmatpush2.msra.mxu0 0.0
        %1856 = vmatprep.subr.mxu0 0.0
        %1857 = vmatpush2.msra.mxu0 0.0
        %1858 = vmatprep.subr.mxu0 0.0
        %1859 = vmatpush2.msra.mxu0 0.0
        %1860 = vmatprep.subr.mxu0 0.0
        %1861 = vmatpush2.msra.mxu0 0.0
        %1862 = vmatprep.subr.mxu0 0.0
        %1863 = vmatpush2.msra.mxu0 0.0
        %1864 = vmatprep.subr.mxu0 0.0
        %1865 = vmatpush2.msra.mxu0 0.0
        %1866 = vmatprep.subr.mxu0 0.0
        %1867 = vmatpush2.msra.mxu0 0.0
        %1868 = vmatprep.subr.mxu0 0.0
        %1869 = vmatpush2.msra.mxu0 0.0
        %1870 = vmatprep.subr.mxu0 0.0
        %1871 = vmatpush2.msra.mxu0 0.0
        %1872 = vmatprep.subr.mxu0 0.0
        %1873 = vmatpush2.msra.mxu0 0.0
        %1874 = vmatprep.subr.mxu0 0.0
        %1875 = vmatpush2.msra.mxu0 0.0
        %1876 = vmatprep.mubr.f32.mxu0 0.0
        %1877 = vmatmul.mubr.f32.gmra.mxu0 %v1801
        %v1878 = vpop.f32.mrf.mxu0
        %v1879 = vadd.f32 %v1798, %v1878
        %v1880 = vpop.f32.mrf.mxu0
        %1881 = vmatprep.mubr.f32.mxu0 0.0
        %1882 = vmatmul.mubr.f32.gmra.mxu0 %v1804
        %v1883 = vpop.f32.mrf.mxu0
        %v1884 = vadd.f32 %v1798, %v1883
        %v1885 = vpop.f32.mrf.mxu0
        %1886 = vmatprep.mubr.f32.mxu0 0.0
        %1887 = vmatmul.mubr.f32.gmra.mxu0 %v1807
        %v1888 = vpop.f32.mrf.mxu0
        %v1889 = vadd.f32 %v1798, %v1888
        %v1890 = vpop.f32.mrf.mxu0
        %1891 = vmatprep.mubr.f32.mxu0 0.0
        %1892 = vmatmul.mubr.f32.gmra.mxu0 %v1810
        %v1893 = vpop.f32.mrf.mxu0
        %v1894 = vadd.f32 %v1798, %v1893
        %v1895 = vpop.f32.mrf.mxu0
        %1896 = vdwg.mxu0
        %v1897 = vmul.f32 %v1879, 0.5
        %v1898 = vmul.f32 %v1884, 0.5
        %v1899 = vmul.f32 %v1889, 0.5
        %v1900 = vmul.f32 %v1894, 0.5
        %v1901 = vmul.f32 %v1879, 0.70710677
        %v1902 = vmul.f32 %v1884, 0.70710677
        %v1903 = vmul.f32 %v1889, 0.70710677
        %v1904 = vmul.f32 %v1894, 0.70710677
        %vm1905 = vcmp.lt.f32.partialorder %v1901, 0.0
        %vm1906 = vcmp.lt.f32.partialorder %v1902, 0.0
        %vm1907 = vcmp.lt.f32.partialorder %v1903, 0.0
        %vm1908 = vcmp.lt.f32.partialorder %v1904, 0.0
        %v1909 = vsel %vm1905, -1.0, 1.0
        %v1910 = vsel %vm1906, -1.0, 1.0
        %v1911 = vsel %vm1907, -1.0, 1.0
        %v1912 = vsel %vm1908, -1.0, 1.0
        %v1913 = vand.u32 2147483647, %v1901
        %v1914 = vand.u32 2147483647, %v1902
        %v1915 = vand.u32 2147483647, %v1903
        %v1916 = vand.u32 2147483647, %v1904
        %v1917 = vmul.f32 %v1913, 0.3275911
        %v1918 = vmul.f32 %v1914, 0.3275911
        %v1919 = vmul.f32 %v1915, 0.3275911
        %v1920 = vmul.f32 %v1916, 0.3275911
        %v1921 = vadd.f32 %v1917, 1.0
        %v1922 = vadd.f32 %v1918, 1.0
        %v1923 = vadd.f32 %v1919, 1.0
        %v1924 = vadd.f32 %v1920, 1.0
        %v1925 = vrcp.pop %v1921
        %v1926 = vmul.f32 1.0, %v1925
        %v1927 = vrcp.pop %v1922
        %v1928 = vmul.f32 1.0, %v1927
        %v1929 = vrcp.pop %v1923
        %v1930 = vmul.f32 1.0, %v1929
        %v1931 = vrcp.pop %v1924
        %v1932 = vmul.f32 1.0, %v1931
        %v1933 = vmul.f32 %v1926, 1.0614054
        %v1934 = vmul.f32 %v1928, 1.0614054
        %v1935 = vmul.f32 %v1930, 1.0614054
        %v1936 = vmul.f32 %v1932, 1.0614054
        %v1937 = vadd.f32 %v1933, -1.4531521
        %v1938 = vadd.f32 %v1934, -1.4531521
        %v1939 = vadd.f32 %v1935, -1.4531521
        %v1940 = vadd.f32 %v1936, -1.4531521
        %v1941 = vmul.f32 %v1937, %v1926
        %v1942 = vmul.f32 %v1938, %v1928
        %v1943 = vmul.f32 %v1939, %v1930
        %v1944 = vmul.f32 %v1940, %v1932
        %v1945 = vadd.f32 %v1941, 1.4214138
        %v1946 = vadd.f32 %v1942, 1.4214138
        %v1947 = vadd.f32 %v1943, 1.4214138
        %v1948 = vadd.f32 %v1944, 1.4214138
        %v1949 = vmul.f32 %v1945, %v1926
        %v1950 = vmul.f32 %v1946, %v1928
        %v1951 = vmul.f32 %v1947, %v1930
        %v1952 = vmul.f32 %v1948, %v1932
        %v1953 = vadd.f32 %v1949, -0.28449672
        %v1954 = vadd.f32 %v1950, -0.28449672
        %v1955 = vadd.f32 %v1951, -0.28449672
        %v1956 = vadd.f32 %v1952, -0.28449672
        %v1957 = vmul.f32 %v1953, %v1926
        %v1958 = vmul.f32 %v1954, %v1928
        %v1959 = vmul.f32 %v1955, %v1930
        %v1960 = vmul.f32 %v1956, %v1932
        %v1961 = vadd.f32 %v1957, 0.2548296
        %v1962 = vadd.f32 %v1958, 0.2548296
        %v1963 = vadd.f32 %v1959, 0.2548296
        %v1964 = vadd.f32 %v1960, 0.2548296
        %v1965 = vmul.f32 %v1961, %v1926
        %v1966 = vmul.f32 %v1962, %v1928
        %v1967 = vmul.f32 %v1963, %v1930
        %v1968 = vmul.f32 %v1964, %v1932
        %v1969 = vsub.f32 0.0, %v1913
        %v1970 = vsub.f32 0.0, %v1914
        %v1971 = vsub.f32 0.0, %v1915
        %v1972 = vsub.f32 0.0, %v1916
        %v1973 = vmul.f32 %v1969, %v1913
        %v1974 = vmul.f32 %v1970, %v1914
        %v1975 = vmul.f32 %v1971, %v1915
        %v1976 = vmul.f32 %v1972, %v1916
        %v1977 = vmul.f32 %v1973, 1.442695
        %v1978 = vpow.pop %v1977
        %v1979 = vmul.f32 %v1974, 1.442695
        %v1980 = vpow.pop %v1979
        %v1981 = vmul.f32 %v1975, 1.442695
        %v1982 = vpow.pop %v1981
        %v1983 = vmul.f32 %v1976, 1.442695
        %v1984 = vpow.pop %v1983
        %v1985 = vmul.f32 %v1965, %v1978
        %v1986 = vmul.f32 %v1966, %v1980
        %v1987 = vmul.f32 %v1967, %v1982
        %v1988 = vmul.f32 %v1968, %v1984
        %v1989 = vsub.f32 1.0, %v1985
        %v1990 = vsub.f32 1.0, %v1986
        %v1991 = vsub.f32 1.0, %v1987
        %v1992 = vsub.f32 1.0, %v1988
        %v1993 = vmul.f32 %v1909, %v1989
        %v1994 = vmul.f32 %v1910, %v1990
        %v1995 = vmul.f32 %v1911, %v1991
        %v1996 = vmul.f32 %v1912, %v1992
        %v1997 = vadd.f32 %v1993, 1.0
        %v1998 = vadd.f32 %v1994, 1.0
        %v1999 = vadd.f32 %v1995, 1.0
        %v2000 = vadd.f32 %v1996, 1.0
        %v2001 = vmul.f32 %v1897, %v1997
        %v2002 = vmul.f32 %v1898, %v1998
        %v2003 = vmul.f32 %v1899, %v1999
        %v2004 = vmul.f32 %v1900, %v2000
        %v2005 = vld [vmem:[%s730] sm:$0xff]
        %v2006 = vld [vmem:[%s730 + $0x8] sm:$0xff]
        %v2007 = vld [vmem:[%s730 + $0x10] sm:$0xff]
        %v2008 = vld [vmem:[%s730 + $0x18] sm:$0xff]
        %v2009 = vld [vmem:[%s730 + $0x20] sm:$0xff]
        %v2010 = vld [vmem:[%s730 + $0x28] sm:$0xff]
        %v2011 = vld [vmem:[%s730 + $0x30] sm:$0xff]
        %v2012 = vld [vmem:[%s730 + $0x38] sm:$0xff]
        %vm2013 = vcmask 523264
        %v2015 = vsel %vm2013, %v2001, 0
        %v2018 = vsel %vm2013, %v2002, 0
        %v2021 = vsel %vm2013, %v2003, 0
        %v2024 = vsel %vm2013, %v2004, 0
        %2026 = vmatprep.subr.mxu0 0.0
        %2027 = vmatpush1.msra.mxu0 0.0
        %2028 = vmatprep.subr.mxu0 0.0
        %2029 = vmatpush1.msra.mxu0 0.0
        %2030 = vmatprep.subr.mxu0 0.0
        %2031 = vmatpush1.msra.mxu0 0.0
        %2032 = vmatprep.subr.mxu0 0.0
        %2033 = vmatpush1.msra.mxu0 0.0
        %2034 = vmatprep.subr.mxu0 0.0
        %2035 = vmatpush1.msra.mxu0 0.0
        %2036 = vmatprep.subr.mxu0 0.0
        %2037 = vmatpush1.msra.mxu0 0.0
        %2038 = vmatprep.subr.mxu0 0.0
        %2039 = vmatpush1.msra.mxu0 0.0
        %2040 = vmatprep.subr.mxu0 0.0
        %2041 = vmatpush1.msra.mxu0 0.0
        %2042 = vmatprep.subr.mxu0 0.0
        %2043 = vmatpush1.msra.mxu0 %v2012
        %2044 = vmatprep.subr.mxu0 0.0
        %2045 = vmatpush1.msra.mxu0 %v2011
        %2046 = vmatprep.subr.mxu0 0.0
        %2047 = vmatpush1.msra.mxu0 %v2010
        %2048 = vmatprep.subr.mxu0 0.0
        %2049 = vmatpush1.msra.mxu0 %v2009
        %2050 = vmatprep.subr.mxu0 0.0
        %2051 = vmatpush1.msra.mxu0 %v2008
        %2052 = vmatprep.subr.mxu0 0.0
        %2053 = vmatpush1.msra.mxu0 %v2007
        %2054 = vmatprep.subr.mxu0 0.0
        %2055 = vmatpush1.msra.mxu0 %v2006
        %2056 = vmatprep.subr.mxu0 0.0
        %2057 = vmatpush1.msra.mxu0 %v2005
        %2058 = vmatprep.subr.mxu0 0.0
        %2059 = vmatpush2.msra.mxu0 0.0
        %2060 = vmatprep.subr.mxu0 0.0
        %2061 = vmatpush2.msra.mxu0 0.0
        %2062 = vmatprep.subr.mxu0 0.0
        %2063 = vmatpush2.msra.mxu0 0.0
        %2064 = vmatprep.subr.mxu0 0.0
        %2065 = vmatpush2.msra.mxu0 0.0
        %2066 = vmatprep.subr.mxu0 0.0
        %2067 = vmatpush2.msra.mxu0 0.0
        %2068 = vmatprep.subr.mxu0 0.0
        %2069 = vmatpush2.msra.mxu0 0.0
        %2070 = vmatprep.subr.mxu0 0.0
        %2071 = vmatpush2.msra.mxu0 0.0
        %2072 = vmatprep.subr.mxu0 0.0
        %2073 = vmatpush2.msra.mxu0 0.0
        %2074 = vmatprep.subr.mxu0 0.0
        %2075 = vmatpush2.msra.mxu0 0.0
        %2076 = vmatprep.subr.mxu0 0.0
        %2077 = vmatpush2.msra.mxu0 0.0
        %2078 = vmatprep.subr.mxu0 0.0
        %2079 = vmatpush2.msra.mxu0 0.0
        %2080 = vmatprep.subr.mxu0 0.0
        %2081 = vmatpush2.msra.mxu0 0.0
        %2082 = vmatprep.subr.mxu0 0.0
        %2083 = vmatpush2.msra.mxu0 0.0
        %2084 = vmatprep.subr.mxu0 0.0
        %2085 = vmatpush2.msra.mxu0 0.0
        %2086 = vmatprep.subr.mxu0 0.0
        %2087 = vmatpush2.msra.mxu0 0.0
        %2088 = vmatprep.subr.mxu0 0.0
        %2089 = vmatpush2.msra.mxu0 0.0
        %2090 = vmatprep.mubr.f32.mxu0 0.0
        %2091 = vmatmul.mubr.f32.gmra.mxu0 %v2015
        %v2092 = vpop.f32.mrf.mxu0
        %v2093 = vadd.f32 0.0, %v2092
        %v2094 = vpop.f32.mrf.mxu0
        %2095 = vmatprep.mubr.f32.mxu0 0.0
        %2096 = vmatmul.mubr.f32.gmra.mxu0 %v2018
        %v2097 = vpop.f32.mrf.mxu0
        %v2098 = vadd.f32 0.0, %v2097
        %v2099 = vpop.f32.mrf.mxu0
        %2100 = vmatprep.mubr.f32.mxu0 0.0
        %2101 = vmatmul.mubr.f32.gmra.mxu0 %v2021
        %v2102 = vpop.f32.mrf.mxu0
        %v2103 = vadd.f32 0.0, %v2102
        %v2104 = vpop.f32.mrf.mxu0
        %2105 = vmatprep.mubr.f32.mxu0 0.0
        %2106 = vmatmul.mubr.f32.gmra.mxu0 %v2024
        %v2107 = vpop.f32.mrf.mxu0
        %v2108 = vadd.f32 0.0, %v2107
        %v2109 = vpop.f32.mrf.mxu0
        %2110 = vdwg.mxu0
        %v2111 = vadd.f32 %v1711, %v2093
        %v2112 = vadd.f32 %v1712, %v2098
        %v2113 = vadd.f32 %v1713, %v2103
        %v2114 = vadd.f32 %v1714, %v2108
        %v2115 = vld [vmem:[%s733] sm:$0x1]
        %v2117 = vlaneseq
        %v2118 = vshrl.u32 %v2117, 7
        %v2119 = vsub.s32 0, %v2118
        %v2120 = vrot.slane %v2115, %v2119
        %v2122 = vadd.f32 %v2111, %v2120
        %v2123 = vadd.f32 %v2112, %v2120
        %v2124 = vadd.f32 %v2113, %v2120
        %v2125 = vadd.f32 %v2114, %v2120
        %p2126 = scmp.lt.s32.totalorder %s30, 1
        // Predicated region
        $region97: #{tinyvit_forward.1} parent=91 // pred_check
          %p2127 = pneg %p2126
        $region98: #{tinyvit_forward.1} parent=91 // pred_check_branch
          %2129 = sbr.rel (%p2127) target = $region100
        $region99: #{tinyvit_forward.1} parent=91 // pred_region
          %2130 = vst.msk [vmem:[#allocation2] sm:$0xff] %vm894, %v2122
          %2131 = vst.msk [vmem:[#allocation2 + $0x8] sm:$0xff] %vm894, %v2123
          %2132 = vst.msk [vmem:[#allocation2 + $0x10] sm:$0xff] %vm894, %v2124
          %2133 = vst.msk [vmem:[#allocation2 + $0x18] sm:$0xff] %vm894, %v2125
        $region100: #{tinyvit_forward.1} parent=91 // pred_fallthru
          _
        %p2134 = scmp.eq.s32.totalorder %s30, 1
        // Predicated region
        $region101: #{tinyvit_forward.1} parent=91 // pred_check
          %p2135 = pneg %p2134
        $region102: #{tinyvit_forward.1} parent=91 // pred_check_branch
          %2137 = sbr.rel (%p2135) target = $region104
        $region103: #{tinyvit_forward.1} parent=91 // pred_region
          %v2138 = vld [vmem:[%s16] sm:$0x1]
          %v2139 = vld [vmem:[%s17] sm:$0x1]
          %v2140 = vsel %vm894, %v2122, 0.0
          %2141 = vadd.xlane.f32.xlu0 %v2140
          %v2142 = vpop.xlane.xlu0 %2141
          %v2143 = vsel %vm894, %v2123, 0.0
          %2144 = vadd.xlane.f32.xlu0 %v2143
          %v2145 = vpop.xlane.xlu0 %2144
          %v2146 = vsel %vm894, %v2124, 0.0
          %2147 = vadd.xlane.f32.xlu0 %v2146
          %v2148 = vpop.xlane.xlu0 %2147
          %v2149 = vsel %vm894, %v2125, 0.0
          %2150 = vadd.xlane.f32.xlu0 %v2149
          %v2151 = vpop.xlane.xlu0 %2150
          %v2152 = vmul.f32 %v2142, %v907
          %v2153 = vmul.f32 %v2145, %v907
          %v2154 = vmul.f32 %v2148, %v907
          %v2155 = vmul.f32 %v2151, %v907
          %v2156 = vsub.f32 %v2122, %v2152
          %v2157 = vsub.f32 %v2123, %v2153
          %v2158 = vsub.f32 %v2124, %v2154
          %v2159 = vsub.f32 %v2125, %v2155
          %v2160 = vmul.f32 %v2156, %v2156
          %v2161 = vmul.f32 %v2157, %v2157
          %v2162 = vmul.f32 %v2158, %v2158
          %v2163 = vmul.f32 %v2159, %v2159
          %v2164 = vsel %vm894, %v2160, 0.0
          %2165 = vadd.xlane.f32.xlu0 %v2164
          %v2166 = vpop.xlane.xlu0 %2165
          %v2167 = vsel %vm894, %v2161, 0.0
          %2168 = vadd.xlane.f32.xlu0 %v2167
          %v2169 = vpop.xlane.xlu0 %2168
          %v2170 = vsel %vm894, %v2162, 0.0
          %2171 = vadd.xlane.f32.xlu0 %v2170
          %v2172 = vpop.xlane.xlu0 %2171
          %v2173 = vsel %vm894, %v2163, 0.0
          %2174 = vadd.xlane.f32.xlu0 %v2173
          %v2175 = vpop.xlane.xlu0 %2174
          %v2176 = vmul.f32 %v2166, %v907
          %v2177 = vmul.f32 %v2169, %v907
          %v2178 = vmul.f32 %v2172, %v907
          %v2179 = vmul.f32 %v2175, %v907
          %v2180 = vadd.f32 %v2176, 1e-05
          %v2181 = vadd.f32 %v2177, 1e-05
          %v2182 = vadd.f32 %v2178, 1e-05
          %v2183 = vadd.f32 %v2179, 1e-05
          %v2184 = vrsqrt.pop %v2180
          %v2185 = vrsqrt.pop %v2181
          %v2186 = vrsqrt.pop %v2182
          %v2187 = vrsqrt.pop %v2183
          %v2188 = vmul.f32 %v2156, %v2184
          %v2189 = vmul.f32 %v2157, %v2185
          %v2190 = vmul.f32 %v2158, %v2186
          %v2191 = vmul.f32 %v2159, %v2187
          %v2193 = vlaneseq
          %v2194 = vshrl.u32 %v2193, 7
          %v2195 = vsub.s32 0, %v2194
          %v2196 = vrot.slane %v2138, %v2195
          %v2198 = vmul.f32 %v2188, %v2196
          %v2199 = vmul.f32 %v2189, %v2196
          %v2200 = vmul.f32 %v2190, %v2196
          %v2201 = vmul.f32 %v2191, %v2196
          %v2203 = vlaneseq
          %v2204 = vshrl.u32 %v2203, 7
          %v2205 = vsub.s32 0, %v2204
          %v2206 = vrot.slane %v2139, %v2205
          %v2208 = vadd.f32 %v2198, %v2206
          %v2209 = vadd.f32 %v2199, %v2206
          %v2210 = vadd.f32 %v2200, %v2206
          %v2211 = vadd.f32 %v2201, %v2206
          %2212 = vst.msk [vmem:[#allocation3] sm:$0xff] %vm894, %v2208
          %2213 = vst.msk [vmem:[#allocation3 + $0x8] sm:$0xff] %vm894, %v2209
          %2214 = vst.msk [vmem:[#allocation3 + $0x10] sm:$0xff] %vm894, %v2210
          %2215 = vst.msk [vmem:[#allocation3 + $0x18] sm:$0xff] %vm894, %v2211
        $region104: #{tinyvit_forward.1} parent=91 // pred_fallthru
          _
        // Predicated region
        $region105: #{tinyvit_forward.1} parent=91 // pred_check
          %p2216 = pneg %p481
        $region106: #{tinyvit_forward.1} parent=91 // pred_check_branch
          %2218 = sbr.rel (%p2216) target = $region108
        $region107: #{tinyvit_forward.1} parent=91 // pred_region
          %s2220 = ssub.s32 512, 512
          %2221 = vsyncadd [#allocation4], %s2220
          %s2222 = sshll.u32 [#allocation3], 4
          %s2223 = int_to_ptr.vmem [resolvable:$true] %s2222
          %2228 = dma.vmem_to_hbm [thread:$0]  %s2223, 512, %s18, [#allocation4], 128, 128, 8
        $region108: #{tinyvit_forward.1} parent=91 // pred_fallthru
          _
        // Predicated region
        $region109: #{tinyvit_forward.1} parent=91 // pred_check
          %p2229 = pneg %p481
        $region110: #{tinyvit_forward.1} parent=91 // pred_check_branch
          %2231 = sbr.rel (%p2229) target = $region112
        $region111: #{tinyvit_forward.1} parent=91 // pred_region
          %2232 = dma.done [#allocation4], 512
        $region112: #{tinyvit_forward.1} parent=91 // pred_fallthru
          _
      $region92: #{tinyvit_forward.1} parent=5 // pred_fallthru
        _
      %p2233 = scmp.le.s32.totalorder 2, %s25
      // Predicated region
      $region113: #{tinyvit_forward.1} parent=5 // pred_check
        %p2234 = pneg %p2233
      $region114: #{tinyvit_forward.1} parent=5 // pred_check_branch
        %2236 = sbr.rel (%p2234) target = $region116
      $region115: #{tinyvit_forward.1} parent=5 // pred_region
        %s2237 = ssub.s32 %s25, 2
      $region116: #{tinyvit_forward.1} parent=5 // pred_fallthru
        _
    $region6: #{tinyvit_forward.1} parent=1 // loop_footer
      %s29 = sadd.s32 1, %s25
    $region7: #{tinyvit_forward.1} parent=1 // loop_footer_branch
      %24 = sbr.rel target = $region3
    $region8: #{tinyvit_forward.1} parent=1 // loop_exit
      _
    %2238 = vsyncpa [#allocation4], 1
    %s2239 = scalar_lea.sflag [#allocation4], 1
    %2240 = vsyncpa %s2239, 1

</llo_original>
